<compile_context>
chip_gen: v7x
topology: tpu7x:2x2x1
jax: 0.10.0
libtpu: 0.0.40
codegen_flags: <defaults>
</compile_context>

<pallas_src>
import functools

import jax
import jax.numpy as jnp
from jax.experimental import pallas as pl
from jax.experimental.pallas import tpu as pltpu

IN_DIM = 784
HID_DIM = 500
OUT_DIM = 10
HID_PAD = 512      # 500 -> 512: fc1 N / fc2 K become exact multiples of 128
OUT_PAD = 128      # 10  -> 128: lane-dense output block (no masked vst)
TB_MAX = 1024      # default batch-tile cap (footprint ~15 MiB, fits all gens)
TB_HARD_MAX = 2048 # absolute cap for user-supplied tile overrides


def _round_up(x, m):
    return (x + m - 1) // m * m


def _cdiv(a, b):
    return (a + b - 1) // b


def mlp_kernel(x_ref, w1_ref, b1_ref, w2_ref, b2_ref, o_ref):
    # In-kernel downcast of the activation tile (f32 -> bf16 on the fast path,
    # no-op on the f32 parity path). MXU matmuls accumulate in f32.
    x = x_ref[...].astype(w1_ref.dtype)
    h = jnp.dot(x, w1_ref[...], preferred_element_type=jnp.float32)
    h = jnp.maximum(h + b1_ref[...], 0.0)
    out = jnp.dot(h.astype(w2_ref.dtype), w2_ref[...],
                  preferred_element_type=jnp.float32)
    o_ref[...] = (out + b2_ref[...]).astype(o_ref.dtype)


def prepare_params(w1, b1, w2, b2, compute_dtype=jnp.bfloat16):
    """One-time preprocessing (hoisted out of the per-call path).

    w1: (500, 784)  b1: (500,)   -- PyTorch nn.Linear layout
    w2: (10, 500)   b2: (10,)
    Returns (w1t, b1p, w2t, b2p):
      w1t: (784, 512) compute_dtype   b1p: (1, 512) f32
      w2t: (512, 128) compute_dtype   b2p: (1, 128) f32
    Padded entries are exactly zero (numerically inert).
    """
    w1t = jnp.zeros((IN_DIM, HID_PAD), jnp.float32).at[:, :HID_DIM].set(
        jnp.asarray(w1, jnp.float32).T)
    b1p = jnp.zeros((1, HID_PAD), jnp.float32).at[:, :HID_DIM].set(
        jnp.asarray(b1, jnp.float32).reshape(1, HID_DIM))
    w2t = jnp.zeros((HID_PAD, OUT_PAD), jnp.float32).at[:HID_DIM, :OUT_DIM].set(
        jnp.asarray(w2, jnp.float32).T)
    b2p = jnp.zeros((1, OUT_PAD), jnp.float32).at[:, :OUT_DIM].set(
        jnp.asarray(b2, jnp.float32).reshape(1, OUT_DIM))
    return (w1t.astype(compute_dtype), b1p, w2t.astype(compute_dtype), b2p)


@functools.partial(jax.jit, static_argnames=("tb",))
def simple_nn_forward(x, params, tb=None):
    """Forward pass matching SimpleNN.forward.

    x:      any shape whose trailing dims flatten to 784 (e.g. (N,1,28,28))
    params: output of prepare_params(...)
    tb:     optional batch-tile override (rounded to a multiple of 8)
    returns (N, 10) float32
    """
    w1t, b1p, w2t, b2p = params

    x2d = x.reshape(-1, IN_DIM)            # glue: view(-1, 784); no dtype cast
    B = x2d.shape[0]

    if tb is None:
        if B <= 256:
            tb = max(8, _round_up(B, 8))   # single tile
        else:
            # >= 2 grid steps so v7x's two TensorCores both get a tile; keep
            # the tile a multiple of 256 so the MXU M-dimension stays full.
            tb = min(TB_MAX, _round_up(_cdiv(B, 2), 256))
    else:
        tb = _round_up(min(tb, TB_HARD_MAX, _round_up(B, 8)), 8)
    grid = (_cdiv(B, tb),)                 # ragged last tile handled by Pallas

    wsize = jnp.dtype(w1t.dtype).itemsize
    xsize = jnp.dtype(x2d.dtype).itemsize
    flops = 2 * B * (IN_DIM * HID_PAD + HID_PAD * OUT_PAD)
    bytes_accessed = (
        x2d.size * xsize
        + w1t.size * wsize + w2t.size * wsize
        + b1p.size * 4 + b2p.size * 4
        + B * OUT_PAD * 4)

    # VMEM footprint estimate: double-buffered x/out tiles, resident weights
    # (conservatively counted with 2 buffers), f32 hidden + its compute copy.
    vmem_est = (
        2 * tb * IN_DIM * xsize
        + 2 * tb * OUT_PAD * 4
        + 2 * (w1t.size + w2t.size) * wsize
        + 2 * (b1p.size + b2p.size) * 4
        + tb * HID_PAD * (4 + wsize))
    vmem_limit = int(min(60 * 2**20, max(32 * 2**20, (vmem_est * 3) // 2)))

    out = pl.pallas_call(
        mlp_kernel,
        out_shape=jax.ShapeDtypeStruct((B, OUT_PAD), jnp.float32),
        grid_spec=pltpu.PrefetchScalarGridSpec(
            num_scalar_prefetch=0,
            grid=grid,
            in_specs=[
                pl.BlockSpec((tb, IN_DIM), lambda i: (i, 0)),        # x: batch-tiled
                pl.BlockSpec((IN_DIM, HID_PAD), lambda i: (0, 0)),   # w1: resident
                pl.BlockSpec((1, HID_PAD), lambda i: (0, 0)),        # b1: resident
                pl.BlockSpec((HID_PAD, OUT_PAD), lambda i: (0, 0)),  # w2: resident
                pl.BlockSpec((1, OUT_PAD), lambda i: (0, 0)),        # b2: resident
            ],
            out_specs=pl.BlockSpec((tb, OUT_PAD), lambda i: (i, 0)),
        ),
        compiler_params=pltpu.CompilerParams(
            dimension_semantics=("parallel",),
            vmem_limit_bytes=vmem_limit),
        cost_estimate=pl.CostEstimate(
            flops=flops, transcendentals=0, bytes_accessed=bytes_accessed),
    )(x2d, w1t, b1p, w2t, b2p)

    return out[:, :OUT_DIM]


def init_params(key):
    """Deterministic init mimicking nn.Linear's uniform(-1/sqrt(fan_in), +)."""
    k1, k2, k3, k4 = jax.random.split(key, 4)
    bound1 = 1.0 / jnp.sqrt(784.0)
    bound2 = 1.0 / jnp.sqrt(500.0)
    w1 = jax.random.uniform(k1, (HID_DIM, IN_DIM), jnp.float32, -bound1, bound1)
    b1 = jax.random.uniform(k2, (HID_DIM,), jnp.float32, -bound1, bound1)
    w2 = jax.random.uniform(k3, (OUT_DIM, HID_DIM), jnp.float32, -bound2, bound2)
    b2 = jax.random.uniform(k4, (OUT_DIM,), jnp.float32, -bound2, bound2)
    return w1, b1, w2, b2


if __name__ == "__main__":
    key = jax.random.PRNGKey(0)
    k_x, k_p = jax.random.split(key)

    w1, b1, w2, b2 = init_params(k_p)

    def ref_fwd(xin):
        x2d = xin.reshape(-1, IN_DIM)
        return jnp.maximum(x2d @ w1.T + b1, 0.0) @ w2.T + b2

    params_bf16 = prepare_params(w1, b1, w2, b2, jnp.bfloat16)
    params_f32 = prepare_params(w1, b1, w2, b2, jnp.float32)

    # 1) MNIST-like small batch (single tile), bf16 matmul path.
    x = jax.random.normal(k_x, (2, 1, 28, 28), jnp.float32)
    out = jax.block_until_ready(simple_nn_forward(x, params_bf16))
    assert out.shape == (2, OUT_DIM)
    assert jnp.allclose(out, ref_fwd(x), atol=3e-2, rtol=3e-2)

    # 2) Ragged multi-tile grid (tb=8 -> 3 steps, last tile partial), f32 parity
    #    path; confirms boundary-block handling with no jnp.pad.
    x20 = jax.random.normal(k_x, (20, 1, 28, 28), jnp.float32)
    out20 = jax.block_until_ready(simple_nn_forward(x20, params_f32, tb=8))
    assert out20.shape == (20, OUT_DIM)
    assert jnp.allclose(out20, ref_fwd(x20), atol=1e-4, rtol=1e-4)

    # 3) Default tile selection with B > 256 -> 2 grid steps (dual-TC split on
    #    v7x) with a ragged boundary block, bf16 path.
    x260 = jax.random.normal(k_x, (260, IN_DIM), jnp.float32)
    out260 = jax.block_until_ready(simple_nn_forward(x260, params_bf16))
    assert out260.shape == (260, OUT_DIM)
    assert jnp.allclose(out260, ref_fwd(x260), atol=3e-2, rtol=3e-2)

    print("KERNEL_OK")
</pallas_src>

<mosaic_0001>
module attributes {stable_mosaic.version = 11 : i64} {
  func.func @mlp_kernel(%arg0: i32, %arg1: memref<8x784xf32, #tpu.memory_space<vmem>>, %arg2: memref<784x512xbf16, #tpu.memory_space<vmem>>, %arg3: memref<1x512xf32, #tpu.memory_space<vmem>>, %arg4: memref<512x128xbf16, #tpu.memory_space<vmem>>, %arg5: memref<1x128xf32, #tpu.memory_space<vmem>>, %arg6: memref<8x128xf32, #tpu.memory_space<vmem>>) attributes {dimension_semantics = [#tpu.dimension_semantics<parallel>], iteration_bounds = array<i64: 1>, scalar_prefetch = 0 : i64, scratch_operands = 0 : i64, tpu.core_type = #tpu.core_type<tc>, window_params = [{transform_indices = @transform_0, window_bounds = array<i64: 8, 784>}, {pipeline_mode = #tpu.pipeline_mode<synchronous>, transform_indices = @transform_1, window_bounds = array<i64: 784, 512>}, {pipeline_mode = #tpu.pipeline_mode<synchronous>, transform_indices = @transform_2, window_bounds = array<i64: 1, 512>}, {pipeline_mode = #tpu.pipeline_mode<synchronous>, transform_indices = @transform_3, window_bounds = array<i64: 512, 128>}, {pipeline_mode = #tpu.pipeline_mode<synchronous>, transform_indices = @transform_4, window_bounds = array<i64: 1, 128>}, {transform_indices = @transform_5, window_bounds = array<i64: 8, 128>}]} {
    %c0 = arith.constant 0 : index
    %c0_0 = arith.constant 0 : index
    %0 = vector.load %arg1[%c0, %c0_0] : memref<8x784xf32, #tpu.memory_space<vmem>>, vector<8x784xf32>
    %1 = arith.truncf %0 : vector<8x784xf32> to vector<8x784xbf16>
    %c0_1 = arith.constant 0 : index
    %c0_2 = arith.constant 0 : index
    %2 = vector.load %arg2[%c0_1, %c0_2] : memref<784x512xbf16, #tpu.memory_space<vmem>>, vector<784x512xbf16>
    %cst = arith.constant dense<0.000000e+00> : vector<8x512xf32>
    %3 = tpu.matmul %1, %2, %cst {dimension_numbers = #tpu.dot_dimension_numbers<[1], [0], [0], [1], [0, 0, 1, 1], [], []>} : vector<8x784xbf16>, vector<784x512xbf16>, vector<8x512xf32> -> vector<8x512xf32>
    %c0_3 = arith.constant 0 : index
    %c0_4 = arith.constant 0 : index
    %4 = vector.load %arg3[%c0_3, %c0_4] : memref<1x512xf32, #tpu.memory_space<vmem>>, vector<1x512xf32>
    %5 = vector.broadcast %4 : vector<1x512xf32> to vector<8x512xf32>
    %6 = arith.addf %3, %5 : vector<8x512xf32>
    %cst_5 = arith.constant 0.000000e+00 : f32
    %7 = vector.broadcast %cst_5 : f32 to vector<8x512xf32>
    %8 = arith.maximumf %6, %7 : vector<8x512xf32>
    %9 = arith.truncf %8 : vector<8x512xf32> to vector<8x512xbf16>
    %c0_6 = arith.constant 0 : index
    %c0_7 = arith.constant 0 : index
    %10 = vector.load %arg4[%c0_6, %c0_7] : memref<512x128xbf16, #tpu.memory_space<vmem>>, vector<512x128xbf16>
    %cst_8 = arith.constant dense<0.000000e+00> : vector<8x128xf32>
    %11 = tpu.matmul %9, %10, %cst_8 {dimension_numbers = #tpu.dot_dimension_numbers<[1], [0], [0], [1], [0, 0, 1, 1], [], []>} : vector<8x512xbf16>, vector<512x128xbf16>, vector<8x128xf32> -> vector<8x128xf32>
    %c0_9 = arith.constant 0 : index
    %c0_10 = arith.constant 0 : index
    %12 = vector.load %arg5[%c0_9, %c0_10] : memref<1x128xf32, #tpu.memory_space<vmem>>, vector<1x128xf32>
    %13 = vector.broadcast %12 : vector<1x128xf32> to vector<8x128xf32>
    %14 = arith.addf %11, %13 : vector<8x128xf32>
    %c0_11 = arith.constant 0 : index
    %c0_12 = arith.constant 0 : index
    %15 = vector.load %arg6[%c0_11, %c0_12] : memref<8x128xf32, #tpu.memory_space<vmem>>, vector<8x128xf32>
    tpu.vector_store %arg6[%c0_11, %c0_12], %14 {strides = array<i32>} : memref<8x128xf32, #tpu.memory_space<vmem>>, vector<8x128xf32>,
    return
  }
  func.func @transform_0(%arg0: i32) -> (i32, i32) {
    %c0_i32 = arith.constant 0 : i32
    %c0_i32_0 = arith.constant 0 : i32
    return %arg0, %c0_i32 : i32, i32
  }
  func.func @transform_1(%arg0: i32) -> (i32, i32) {
    %c0_i32 = arith.constant 0 : i32
    %c0_i32_0 = arith.constant 0 : i32
    %c0_i32_1 = arith.constant 0 : i32
    return %c0_i32, %c0_i32_0 : i32, i32
  }
  func.func @transform_2(%arg0: i32) -> (i32, i32) {
    %c0_i32 = arith.constant 0 : i32
    %c0_i32_0 = arith.constant 0 : i32
    %c0_i32_1 = arith.constant 0 : i32
    return %c0_i32, %c0_i32_0 : i32, i32
  }
  func.func @transform_3(%arg0: i32) -> (i32, i32) {
    %c0_i32 = arith.constant 0 : i32
    %c0_i32_0 = arith.constant 0 : i32
    %c0_i32_1 = arith.constant 0 : i32
    return %c0_i32, %c0_i32_0 : i32, i32
  }
  func.func @transform_4(%arg0: i32) -> (i32, i32) {
    %c0_i32 = arith.constant 0 : i32
    %c0_i32_0 = arith.constant 0 : i32
    %c0_i32_1 = arith.constant 0 : i32
    return %c0_i32, %c0_i32_0 : i32, i32
  }
  func.func @transform_5(%arg0: i32) -> (i32, i32) {
    %c0_i32 = arith.constant 0 : i32
    %c0_i32_0 = arith.constant 0 : i32
    return %arg0, %c0_i32 : i32, i32
  }
}

</mosaic_0001>

<llo_original>
// kernel: simple_nn_forward.1
$region0: #{simple_nn_forward.1}
  #allocation0 [shape = 'u32[]', space=smem, size = 0x4, offset = 0x4, fixed_abs, tag = 'smem constant byte address 0x4 - core index']
  #allocation1 [shape = 'u32[144,128]{1,0:T(1,128)}', space=vmem, size = 0x12000, scoped, tag = 'internal scratch']
  %s0 = inlined_call_operand.vmem [shape: f32[2,784], index: 0, kind: input, shape index: {}]
  %s1 = inlined_call_operand.hbm [shape: bf16[784,512], index: 1, kind: input, shape index: {}]
  %s2 = inlined_call_operand.vmem [shape: f32[1,512], index: 2, kind: input, shape index: {}]
  %s3 = inlined_call_operand.hbm [shape: bf16[512,128], index: 3, kind: input, shape index: {}]
  %s4 = inlined_call_operand.vmem [shape: f32[1,128], index: 4, kind: input, shape index: {}]
  %s5 = inlined_call_operand.hbm [shape: f32[2,128], index: 5, kind: output, shape index: {}]
  %s6 = sld [smem:[#allocation0]]
  $region38: #{simple_nn_forward.1} parent=0
    _
  %s8 = ssub.s32 1, %s6
  %s9 = scalar_select 0, %s8, %s6
  $region1: #{simple_nn_forward.1} parent=0
    #allocation2 [shape = 'u8[802816]{0}', space=vmem, size = 0xc4000, scoped, tag = 'input window, operand 1, single buffered']
    #allocation3 [shape = 's32[1]{0}', space=sflag, size = 0x4, scoped, tag = 'scoped memory for simple_nn_forward.1']
    #allocation4 [shape = 's32[1]{0}', space=sflag, size = 0x4, scoped, tag = 'scoped memory for simple_nn_forward.1']
    #allocation5 [shape = 'u8[131072]{0}', space=vmem, size = 0x20000, scoped, tag = 'input window, operand 3, single buffered']
    #allocation6 [shape = 's32[1]{0}', space=sflag, size = 0x4, scoped, tag = 'scoped memory for simple_nn_forward.1']
    #allocation7 [shape = 'u8[4096]{0}', space=vmem, size = 0x1000, scoped, tag = 'output window, operand 0, single buffered']
    %10 = vsyncpa [#allocation3], 0
    %11 = vsyncpa [#allocation6], 0
    %12 = vsyncpa [#allocation4], 0
    // Predicated region
    $region2: #{simple_nn_forward.1} parent=1 // pred_check
      _
    $region3: #{simple_nn_forward.1} parent=1 // pred_check_branch
      %14 = sbr.rel (0) target = $region5
    $region4: #{simple_nn_forward.1} parent=1 // pred_region
      _
    $region5: #{simple_nn_forward.1} parent=1 // pred_fallthru
      _
    // Predicated region
    $region6: #{simple_nn_forward.1} parent=1 // pred_check
      _
    $region7: #{simple_nn_forward.1} parent=1 // pred_check_branch
      %16 = sbr.rel (0) target = $region9
    $region8: #{simple_nn_forward.1} parent=1 // pred_region
      %s18 = ssub.s32 25088, 25088
      %19 = vsyncadd [#allocation3], %s18
      %s20 = sshll.u32 [#allocation2], 4
      %s21 = int_to_ptr.vmem [resolvable:$true] %s20
      %26 = dma.hbm_to_vmem [thread:$0]  %s1, 25088, %s21, [#allocation3], 256, 256, 16
    $region9: #{simple_nn_forward.1} parent=1 // pred_fallthru
      _
    // Predicated region
    $region10: #{simple_nn_forward.1} parent=1 // pred_check
      _
    $region11: #{simple_nn_forward.1} parent=1 // pred_check_branch
      %28 = sbr.rel (0) target = $region13
    $region12: #{simple_nn_forward.1} parent=1 // pred_region
      _
    $region13: #{simple_nn_forward.1} parent=1 // pred_fallthru
      _
    // Predicated region
    $region14: #{simple_nn_forward.1} parent=1 // pred_check
      _
    $region15: #{simple_nn_forward.1} parent=1 // pred_check_branch
      %30 = sbr.rel (0) target = $region17
    $region16: #{simple_nn_forward.1} parent=1 // pred_region
      %s32 = ssub.s32 4096, 4096
      %33 = vsyncadd [#allocation6], %s32
      %s34 = sshll.u32 [#allocation5], 4
      %s35 = int_to_ptr.vmem [resolvable:$true] %s34
      %40 = dma.hbm_to_vmem [thread:$0]  %s3, 4096, %s35, [#allocation6], 64, 64, 4
    $region17: #{simple_nn_forward.1} parent=1 // pred_fallthru
      _
    // Predicated region
    $region18: #{simple_nn_forward.1} parent=1 // pred_check
      _
    $region19: #{simple_nn_forward.1} parent=1 // pred_check_branch
      %42 = sbr.rel (0) target = $region21
    $region20: #{simple_nn_forward.1} parent=1 // pred_region
      _
    $region21: #{simple_nn_forward.1} parent=1 // pred_fallthru
      _
    // Predicated region
    $region22: #{simple_nn_forward.1} parent=1 // pred_check
      _
    $region23: #{simple_nn_forward.1} parent=1 // pred_check_branch
      %44 = sbr.rel (0) target = $region25
    $region24: #{simple_nn_forward.1} parent=1 // pred_region
      %45 = dma.done [#allocation3], 25088
    $region25: #{simple_nn_forward.1} parent=1 // pred_fallthru
      _
    // Predicated region
    $region26: #{simple_nn_forward.1} parent=1 // pred_check
      _
    $region27: #{simple_nn_forward.1} parent=1 // pred_check_branch
      %47 = sbr.rel (0) target = $region29
    $region28: #{simple_nn_forward.1} parent=1 // pred_region
      %48 = dma.done [#allocation6], 4096
    $region29: #{simple_nn_forward.1} parent=1 // pred_fallthru
      _
    %v50 = vld [vmem:[%s0] sm:$0xff]
    %v51 = vld [vmem:[%s0 + $0x8] sm:$0x3f]
    %v52 = vld [vmem:[%s0 + $0xe] sm:$0xff]
    %v53 = vld [vmem:[%s0 + $0x16] sm:$0x3f]
    %v54 = vld [vmem:[%s0 + $0x1c] sm:$0xff]
    %v55 = vld [vmem:[%s0 + $0x24] sm:$0x3f]
    %v56 = vld [vmem:[%s0 + $0x2a] sm:$0xff]
    %v57 = vld [vmem:[%s0 + $0x32] sm:$0x3f]
    %v66 = vcombine.low %v50, %v52
    %v67 = vcombine.high %v50, %v52
    %v68 = vcombine.low %v54, %v56
    %v69 = vcombine.high %v54, %v56
    %v71 = vunpack.c.l.s4 1983009808
    %v72 = vunpack.c.0.s8 %v71
    %v73 = vlaneseq
    %v74 = vshrl.u32 %v73, 7
    %v75 = vsub.s32 %v72, %v74
    %v76 = vrot.slane %v66, %v75
    %v78 = vunpack.c.l.s4 1983009808
    %v79 = vunpack.c.0.s8 %v78
    %v80 = vlaneseq
    %v81 = vshrl.u32 %v80, 7
    %v82 = vsub.s32 %v79, %v81
    %v83 = vrot.slane %v67, %v82
    %v85 = vunpack.c.l.s4 1983009808
    %v86 = vunpack.c.0.s8 %v85
    %v87 = vlaneseq
    %v88 = vshrl.u32 %v87, 7
    %v89 = vsub.s32 %v86, %v88
    %v90 = vrot.slane %v68, %v89
    %v92 = vunpack.c.l.s4 1983009808
    %v93 = vunpack.c.0.s8 %v92
    %v94 = vlaneseq
    %v95 = vshrl.u32 %v94, 7
    %v96 = vsub.s32 %v93, %v95
    %v97 = vrot.slane %v69, %v96
    %v98 = vcombine.low %v76, %v90
    %v99 = vcombine.high %v76, %v90
    %v100 = vcombine.low %v83, %v97
    %v101 = vcombine.high %v83, %v97
    %v102 = vcombine.low %v51, %v53
    %v103 = vcombine.high %v51, %v53
    %v104 = vcombine.low %v55, %v57
    %v105 = vcombine.high %v55, %v57
    %v107 = vunpack.c.l.s4 1983009808
    %v108 = vunpack.c.0.s8 %v107
    %v109 = vlaneseq
    %v110 = vshrl.u32 %v109, 7
    %v111 = vsub.s32 %v108, %v110
    %v112 = vrot.slane %v102, %v111
    %v114 = vunpack.c.l.s4 1983009808
    %v115 = vunpack.c.0.s8 %v114
    %v116 = vlaneseq
    %v117 = vshrl.u32 %v116, 7
    %v118 = vsub.s32 %v115, %v117
    %v119 = vrot.slane %v103, %v118
    %v121 = vunpack.c.l.s4 1983009808
    %v122 = vunpack.c.0.s8 %v121
    %v123 = vlaneseq
    %v124 = vshrl.u32 %v123, 7
    %v125 = vsub.s32 %v122, %v124
    %v126 = vrot.slane %v104, %v125
    %v128 = vunpack.c.l.s4 1983009808
    %v129 = vunpack.c.0.s8 %v128
    %v130 = vlaneseq
    %v131 = vshrl.u32 %v130, 7
    %v132 = vsub.s32 %v129, %v131
    %v133 = vrot.slane %v105, %v132
    %v134 = vcombine.low %v112, %v126
    %v135 = vcombine.high %v112, %v126
    %v136 = vcombine.low %v119, %v133
    %v144 = vpack.c.bf16 %v98, %v98
    %v145 = vpack.c.bf16 %v99, %v99
    %v146 = vpack.c.bf16 %v100, %v100
    %v147 = vpack.c.bf16 %v101, %v101
    %v148 = vpack.c.bf16 %v134, %v134
    %v149 = vpack.c.bf16 %v135, %v135
    %v150 = vpack.c.bf16 %v136, %v136
    %v151 = vld [vmem:[#allocation2] sm:$0xff]
    %v152 = vld [vmem:[#allocation2 + $0x8] sm:$0xff]
    %v153 = vld [vmem:[#allocation2 + $0x10] sm:$0xff]
    %v154 = vld [vmem:[#allocation2 + $0x18] sm:$0xff]
    %v155 = vld [vmem:[#allocation2 + $0x20] sm:$0xff]
    %v156 = vld [vmem:[#allocation2 + $0x28] sm:$0xff]
    %v157 = vld [vmem:[#allocation2 + $0x30] sm:$0xff]
    %v158 = vld [vmem:[#allocation2 + $0x38] sm:$0xff]
    %v159 = vld [vmem:[#allocation2 + $0x40] sm:$0xff]
    %v160 = vld [vmem:[#allocation2 + $0x48] sm:$0xff]
    %v161 = vld [vmem:[#allocation2 + $0x50] sm:$0xff]
    %v162 = vld [vmem:[#allocation2 + $0x58] sm:$0xff]
    %v163 = vld [vmem:[#allocation2 + $0x60] sm:$0xff]
    %v164 = vld [vmem:[#allocation2 + $0x68] sm:$0xff]
    %v165 = vld [vmem:[#allocation2 + $0x70] sm:$0xff]
    %v166 = vld [vmem:[#allocation2 + $0x78] sm:$0xff]
    %v167 = vld [vmem:[#allocation2 + $0x80] sm:$0xff]
    %v168 = vld [vmem:[#allocation2 + $0x88] sm:$0xff]
    %v169 = vld [vmem:[#allocation2 + $0x90] sm:$0xff]
    %v170 = vld [vmem:[#allocation2 + $0x98] sm:$0xff]
    %v171 = vld [vmem:[#allocation2 + $0xa0] sm:$0xff]
    %v172 = vld [vmem:[#allocation2 + $0xa8] sm:$0xff]
    %v173 = vld [vmem:[#allocation2 + $0xb0] sm:$0xff]
    %v174 = vld [vmem:[#allocation2 + $0xb8] sm:$0xff]
    %v175 = vld [vmem:[#allocation2 + $0xc0] sm:$0xff]
    %v176 = vld [vmem:[#allocation2 + $0xc8] sm:$0xff]
    %v177 = vld [vmem:[#allocation2 + $0xd0] sm:$0xff]
    %v178 = vld [vmem:[#allocation2 + $0xd8] sm:$0xff]
    %v179 = vld [vmem:[#allocation2 + $0xe0] sm:$0xff]
    %v180 = vld [vmem:[#allocation2 + $0xe8] sm:$0xff]
    %v181 = vld [vmem:[#allocation2 + $0xf0] sm:$0xff]
    %v182 = vld [vmem:[#allocation2 + $0xf8] sm:$0xff]
    %v183 = vld [vmem:[#allocation2 + $0x100] sm:$0xff]
    %v184 = vld [vmem:[#allocation2 + $0x108] sm:$0xff]
    %v185 = vld [vmem:[#allocation2 + $0x110] sm:$0xff]
    %v186 = vld [vmem:[#allocation2 + $0x118] sm:$0xff]
    %v187 = vld [vmem:[#allocation2 + $0x120] sm:$0xff]
    %v188 = vld [vmem:[#allocation2 + $0x128] sm:$0xff]
    %v189 = vld [vmem:[#allocation2 + $0x130] sm:$0xff]
    %v190 = vld [vmem:[#allocation2 + $0x138] sm:$0xff]
    %v191 = vld [vmem:[#allocation2 + $0x140] sm:$0xff]
    %v192 = vld [vmem:[#allocation2 + $0x148] sm:$0xff]
    %v193 = vld [vmem:[#allocation2 + $0x150] sm:$0xff]
    %v194 = vld [vmem:[#allocation2 + $0x158] sm:$0xff]
    %v195 = vld [vmem:[#allocation2 + $0x160] sm:$0xff]
    %v196 = vld [vmem:[#allocation2 + $0x168] sm:$0xff]
    %v197 = vld [vmem:[#allocation2 + $0x170] sm:$0xff]
    %v198 = vld [vmem:[#allocation2 + $0x178] sm:$0xff]
    %v199 = vld [vmem:[#allocation2 + $0x180] sm:$0xff]
    %v200 = vld [vmem:[#allocation2 + $0x188] sm:$0xff]
    %v201 = vld [vmem:[#allocation2 + $0x190] sm:$0xff]
    %v202 = vld [vmem:[#allocation2 + $0x198] sm:$0xff]
    %v203 = vld [vmem:[#allocation2 + $0x1a0] sm:$0xff]
    %v204 = vld [vmem:[#allocation2 + $0x1a8] sm:$0xff]
    %v205 = vld [vmem:[#allocation2 + $0x1b0] sm:$0xff]
    %v206 = vld [vmem:[#allocation2 + $0x1b8] sm:$0xff]
    %v207 = vld [vmem:[#allocation2 + $0x1c0] sm:$0xff]
    %v208 = vld [vmem:[#allocation2 + $0x1c8] sm:$0xff]
    %v209 = vld [vmem:[#allocation2 + $0x1d0] sm:$0xff]
    %v210 = vld [vmem:[#allocation2 + $0x1d8] sm:$0xff]
    %v211 = vld [vmem:[#allocation2 + $0x1e0] sm:$0xff]
    %v212 = vld [vmem:[#allocation2 + $0x1e8] sm:$0xff]
    %v213 = vld [vmem:[#allocation2 + $0x1f0] sm:$0xff]
    %v214 = vld [vmem:[#allocation2 + $0x1f8] sm:$0xff]
    %v215 = vld [vmem:[#allocation2 + $0x200] sm:$0xff]
    %v216 = vld [vmem:[#allocation2 + $0x208] sm:$0xff]
    %v217 = vld [vmem:[#allocation2 + $0x210] sm:$0xff]
    %v218 = vld [vmem:[#allocation2 + $0x218] sm:$0xff]
    %v219 = vld [vmem:[#allocation2 + $0x220] sm:$0xff]
    %v220 = vld [vmem:[#allocation2 + $0x228] sm:$0xff]
    %v221 = vld [vmem:[#allocation2 + $0x230] sm:$0xff]
    %v222 = vld [vmem:[#allocation2 + $0x238] sm:$0xff]
    %v223 = vld [vmem:[#allocation2 + $0x240] sm:$0xff]
    %v224 = vld [vmem:[#allocation2 + $0x248] sm:$0xff]
    %v225 = vld [vmem:[#allocation2 + $0x250] sm:$0xff]
    %v226 = vld [vmem:[#allocation2 + $0x258] sm:$0xff]
    %v227 = vld [vmem:[#allocation2 + $0x260] sm:$0xff]
    %v228 = vld [vmem:[#allocation2 + $0x268] sm:$0xff]
    %v229 = vld [vmem:[#allocation2 + $0x270] sm:$0xff]
    %v230 = vld [vmem:[#allocation2 + $0x278] sm:$0xff]
    %v231 = vld [vmem:[#allocation2 + $0x280] sm:$0xff]
    %v232 = vld [vmem:[#allocation2 + $0x288] sm:$0xff]
    %v233 = vld [vmem:[#allocation2 + $0x290] sm:$0xff]
    %v234 = vld [vmem:[#allocation2 + $0x298] sm:$0xff]
    %v235 = vld [vmem:[#allocation2 + $0x2a0] sm:$0xff]
    %v236 = vld [vmem:[#allocation2 + $0x2a8] sm:$0xff]
    %v237 = vld [vmem:[#allocation2 + $0x2b0] sm:$0xff]
    %v238 = vld [vmem:[#allocation2 + $0x2b8] sm:$0xff]
    %v239 = vld [vmem:[#allocation2 + $0x2c0] sm:$0xff]
    %v240 = vld [vmem:[#allocation2 + $0x2c8] sm:$0xff]
    %v241 = vld [vmem:[#allocation2 + $0x2d0] sm:$0xff]
    %v242 = vld [vmem:[#allocation2 + $0x2d8] sm:$0xff]
    %v243 = vld [vmem:[#allocation2 + $0x2e0] sm:$0xff]
    %v244 = vld [vmem:[#allocation2 + $0x2e8] sm:$0xff]
    %v245 = vld [vmem:[#allocation2 + $0x2f0] sm:$0xff]
    %v246 = vld [vmem:[#allocation2 + $0x2f8] sm:$0xff]
    %v247 = vld [vmem:[#allocation2 + $0x300] sm:$0xff]
    %v248 = vld [vmem:[#allocation2 + $0x308] sm:$0xff]
    %v249 = vld [vmem:[#allocation2 + $0x310] sm:$0xff]
    %v250 = vld [vmem:[#allocation2 + $0x318] sm:$0xff]
    %v251 = vld [vmem:[#allocation2 + $0x320] sm:$0xff]
    %v252 = vld [vmem:[#allocation2 + $0x328] sm:$0xff]
    %v253 = vld [vmem:[#allocation2 + $0x330] sm:$0xff]
    %v254 = vld [vmem:[#allocation2 + $0x338] sm:$0xff]
    %v255 = vld [vmem:[#allocation2 + $0x340] sm:$0xff]
    %v256 = vld [vmem:[#allocation2 + $0x348] sm:$0xff]
    %v257 = vld [vmem:[#allocation2 + $0x350] sm:$0xff]
    %v258 = vld [vmem:[#allocation2 + $0x358] sm:$0xff]
    %v259 = vld [vmem:[#allocation2 + $0x360] sm:$0xff]
    %v260 = vld [vmem:[#allocation2 + $0x368] sm:$0xff]
    %v261 = vld [vmem:[#allocation2 + $0x370] sm:$0xff]
    %v262 = vld [vmem:[#allocation2 + $0x378] sm:$0xff]
    %v263 = vld [vmem:[#allocation2 + $0x380] sm:$0xff]
    %v264 = vld [vmem:[#allocation2 + $0x388] sm:$0xff]
    %v265 = vld [vmem:[#allocation2 + $0x390] sm:$0xff]
    %v266 = vld [vmem:[#allocation2 + $0x398] sm:$0xff]
    %v267 = vld [vmem:[#allocation2 + $0x3a0] sm:$0xff]
    %v268 = vld [vmem:[#allocation2 + $0x3a8] sm:$0xff]
    %v269 = vld [vmem:[#allocation2 + $0x3b0] sm:$0xff]
    %v270 = vld [vmem:[#allocation2 + $0x3b8] sm:$0xff]
    %v271 = vld [vmem:[#allocation2 + $0x3c0] sm:$0xff]
    %v272 = vld [vmem:[#allocation2 + $0x3c8] sm:$0xff]
    %v273 = vld [vmem:[#allocation2 + $0x3d0] sm:$0xff]
    %v274 = vld [vmem:[#allocation2 + $0x3d8] sm:$0xff]
    %v275 = vld [vmem:[#allocation2 + $0x3e0] sm:$0xff]
    %v276 = vld [vmem:[#allocation2 + $0x3e8] sm:$0xff]
    %v277 = vld [vmem:[#allocation2 + $0x3f0] sm:$0xff]
    %v278 = vld [vmem:[#allocation2 + $0x3f8] sm:$0xff]
    %v279 = vld [vmem:[#allocation2 + $0x400] sm:$0xff]
    %v280 = vld [vmem:[#allocation2 + $0x408] sm:$0xff]
    %v281 = vld [vmem:[#allocation2 + $0x410] sm:$0xff]
    %v282 = vld [vmem:[#allocation2 + $0x418] sm:$0xff]
    %v283 = vld [vmem:[#allocation2 + $0x420] sm:$0xff]
    %v284 = vld [vmem:[#allocation2 + $0x428] sm:$0xff]
    %v285 = vld [vmem:[#allocation2 + $0x430] sm:$0xff]
    %v286 = vld [vmem:[#allocation2 + $0x438] sm:$0xff]
    %v287 = vld [vmem:[#allocation2 + $0x440] sm:$0xff]
    %v288 = vld [vmem:[#allocation2 + $0x448] sm:$0xff]
    %v289 = vld [vmem:[#allocation2 + $0x450] sm:$0xff]
    %v290 = vld [vmem:[#allocation2 + $0x458] sm:$0xff]
    %v291 = vld [vmem:[#allocation2 + $0x460] sm:$0xff]
    %v292 = vld [vmem:[#allocation2 + $0x468] sm:$0xff]
    %v293 = vld [vmem:[#allocation2 + $0x470] sm:$0xff]
    %v294 = vld [vmem:[#allocation2 + $0x478] sm:$0xff]
    %v295 = vld [vmem:[#allocation2 + $0x480] sm:$0xff]
    %v296 = vld [vmem:[#allocation2 + $0x488] sm:$0xff]
    %v297 = vld [vmem:[#allocation2 + $0x490] sm:$0xff]
    %v298 = vld [vmem:[#allocation2 + $0x498] sm:$0xff]
    %v299 = vld [vmem:[#allocation2 + $0x4a0] sm:$0xff]
    %v300 = vld [vmem:[#allocation2 + $0x4a8] sm:$0xff]
    %v301 = vld [vmem:[#allocation2 + $0x4b0] sm:$0xff]
    %v302 = vld [vmem:[#allocation2 + $0x4b8] sm:$0xff]
    %v303 = vld [vmem:[#allocation2 + $0x4c0] sm:$0xff]
    %v304 = vld [vmem:[#allocation2 + $0x4c8] sm:$0xff]
    %v305 = vld [vmem:[#allocation2 + $0x4d0] sm:$0xff]
    %v306 = vld [vmem:[#allocation2 + $0x4d8] sm:$0xff]
    %v307 = vld [vmem:[#allocation2 + $0x4e0] sm:$0xff]
    %v308 = vld [vmem:[#allocation2 + $0x4e8] sm:$0xff]
    %v309 = vld [vmem:[#allocation2 + $0x4f0] sm:$0xff]
    %v310 = vld [vmem:[#allocation2 + $0x4f8] sm:$0xff]
    %v311 = vld [vmem:[#allocation2 + $0x500] sm:$0xff]
    %v312 = vld [vmem:[#allocation2 + $0x508] sm:$0xff]
    %v313 = vld [vmem:[#allocation2 + $0x510] sm:$0xff]
    %v314 = vld [vmem:[#allocation2 + $0x518] sm:$0xff]
    %v315 = vld [vmem:[#allocation2 + $0x520] sm:$0xff]
    %v316 = vld [vmem:[#allocation2 + $0x528] sm:$0xff]
    %v317 = vld [vmem:[#allocation2 + $0x530] sm:$0xff]
    %v318 = vld [vmem:[#allocation2 + $0x538] sm:$0xff]
    %v319 = vld [vmem:[#allocation2 + $0x540] sm:$0xff]
    %v320 = vld [vmem:[#allocation2 + $0x548] sm:$0xff]
    %v321 = vld [vmem:[#allocation2 + $0x550] sm:$0xff]
    %v322 = vld [vmem:[#allocation2 + $0x558] sm:$0xff]
    %v323 = vld [vmem:[#allocation2 + $0x560] sm:$0xff]
    %v324 = vld [vmem:[#allocation2 + $0x568] sm:$0xff]
    %v325 = vld [vmem:[#allocation2 + $0x570] sm:$0xff]
    %v326 = vld [vmem:[#allocation2 + $0x578] sm:$0xff]
    %v327 = vld [vmem:[#allocation2 + $0x580] sm:$0xff]
    %v328 = vld [vmem:[#allocation2 + $0x588] sm:$0xff]
    %v329 = vld [vmem:[#allocation2 + $0x590] sm:$0xff]
    %v330 = vld [vmem:[#allocation2 + $0x598] sm:$0xff]
    %v331 = vld [vmem:[#allocation2 + $0x5a0] sm:$0xff]
    %v332 = vld [vmem:[#allocation2 + $0x5a8] sm:$0xff]
    %v333 = vld [vmem:[#allocation2 + $0x5b0] sm:$0xff]
    %v334 = vld [vmem:[#allocation2 + $0x5b8] sm:$0xff]
    %v335 = vld [vmem:[#allocation2 + $0x5c0] sm:$0xff]
    %v336 = vld [vmem:[#allocation2 + $0x5c8] sm:$0xff]
    %v337 = vld [vmem:[#allocation2 + $0x5d0] sm:$0xff]
    %v338 = vld [vmem:[#allocation2 + $0x5d8] sm:$0xff]
    %v339 = vld [vmem:[#allocation2 + $0x5e0] sm:$0xff]
    %v340 = vld [vmem:[#allocation2 + $0x5e8] sm:$0xff]
    %v341 = vld [vmem:[#allocation2 + $0x5f0] sm:$0xff]
    %v342 = vld [vmem:[#allocation2 + $0x5f8] sm:$0xff]
    %v343 = vld [vmem:[#allocation2 + $0x600] sm:$0xff]
    %v344 = vld [vmem:[#allocation2 + $0x608] sm:$0xff]
    %v345 = vld [vmem:[#allocation2 + $0x610] sm:$0xff]
    %v346 = vld [vmem:[#allocation2 + $0x618] sm:$0xff]
    %v347 = vld [vmem:[%s2] sm:$0xf]
    %v349 = vlaneseq
    %v350 = vshrl.u32 %v349, 7
    %v351 = vsub.s32 0, %v350
    %v352 = vrot.slane %v347, %v351
    %v353 = vlaneseq
    %v354 = vshrl.u32 %v353, 7
    %v355 = vsub.s32 1, %v354
    %v356 = vrot.slane %v347, %v355
    %v357 = vlaneseq
    %v358 = vshrl.u32 %v357, 7
    %v359 = vsub.s32 2, %v358
    %v360 = vrot.slane %v347, %v359
    %v361 = vlaneseq
    %v362 = vshrl.u32 %v361, 7
    %v363 = vsub.s32 3, %v362
    %v364 = vrot.slane %v347, %v363
    %v565 = vunpack.c.l.b16 %v151
    %v566 = vunpack.c.h.b16 %v151
    %v567 = vunpack.c.l.b16 %v152
    %v568 = vunpack.c.h.b16 %v152
    %v569 = vunpack.c.l.b16 %v153
    %v570 = vunpack.c.h.b16 %v153
    %v571 = vunpack.c.l.b16 %v154
    %v572 = vunpack.c.h.b16 %v154
    %v573 = vunpack.c.l.b16 %v155
    %v574 = vunpack.c.h.b16 %v155
    %v575 = vunpack.c.l.b16 %v156
    %v576 = vunpack.c.h.b16 %v156
    %v577 = vunpack.c.l.b16 %v157
    %v578 = vunpack.c.h.b16 %v157
    %v579 = vunpack.c.l.b16 %v158
    %v580 = vunpack.c.h.b16 %v158
    %v581 = vunpack.c.l.b16 %v159
    %v582 = vunpack.c.h.b16 %v159
    %v583 = vunpack.c.l.b16 %v160
    %v584 = vunpack.c.h.b16 %v160
    %v585 = vunpack.c.l.b16 %v161
    %v586 = vunpack.c.h.b16 %v161
    %v587 = vunpack.c.l.b16 %v162
    %v588 = vunpack.c.h.b16 %v162
    %v589 = vunpack.c.l.b16 %v163
    %v590 = vunpack.c.h.b16 %v163
    %v591 = vunpack.c.l.b16 %v164
    %v592 = vunpack.c.h.b16 %v164
    %v593 = vunpack.c.l.b16 %v165
    %v594 = vunpack.c.h.b16 %v165
    %v595 = vunpack.c.l.b16 %v166
    %v596 = vunpack.c.h.b16 %v166
    %v597 = vunpack.c.l.b16 %v167
    %v598 = vunpack.c.h.b16 %v167
    %v599 = vunpack.c.l.b16 %v168
    %v600 = vunpack.c.h.b16 %v168
    %v601 = vunpack.c.l.b16 %v169
    %v602 = vunpack.c.h.b16 %v169
    %v603 = vunpack.c.l.b16 %v170
    %v604 = vunpack.c.h.b16 %v170
    %v605 = vunpack.c.l.b16 %v171
    %v606 = vunpack.c.h.b16 %v171
    %v607 = vunpack.c.l.b16 %v172
    %v608 = vunpack.c.h.b16 %v172
    %v609 = vunpack.c.l.b16 %v173
    %v610 = vunpack.c.h.b16 %v173
    %v611 = vunpack.c.l.b16 %v174
    %v612 = vunpack.c.h.b16 %v174
    %v613 = vunpack.c.l.b16 %v175
    %v614 = vunpack.c.h.b16 %v175
    %v615 = vunpack.c.l.b16 %v176
    %v616 = vunpack.c.h.b16 %v176
    %v617 = vunpack.c.l.b16 %v177
    %v618 = vunpack.c.h.b16 %v177
    %v619 = vunpack.c.l.b16 %v178
    %v620 = vunpack.c.h.b16 %v178
    %v621 = vunpack.c.l.b16 %v179
    %v622 = vunpack.c.h.b16 %v179
    %v623 = vunpack.c.l.b16 %v180
    %v624 = vunpack.c.h.b16 %v180
    %v625 = vunpack.c.l.b16 %v181
    %v626 = vunpack.c.h.b16 %v181
    %v627 = vunpack.c.l.b16 %v182
    %v628 = vunpack.c.h.b16 %v182
    %v629 = vunpack.c.l.b16 %v183
    %v630 = vunpack.c.h.b16 %v183
    %v631 = vunpack.c.l.b16 %v184
    %v632 = vunpack.c.h.b16 %v184
    %v633 = vunpack.c.l.b16 %v185
    %v634 = vunpack.c.h.b16 %v185
    %v635 = vunpack.c.l.b16 %v186
    %v636 = vunpack.c.h.b16 %v186
    %v637 = vunpack.c.l.b16 %v187
    %v638 = vunpack.c.h.b16 %v187
    %v639 = vunpack.c.l.b16 %v188
    %v640 = vunpack.c.h.b16 %v188
    %v641 = vunpack.c.l.b16 %v189
    %v642 = vunpack.c.h.b16 %v189
    %v643 = vunpack.c.l.b16 %v190
    %v644 = vunpack.c.h.b16 %v190
    %v645 = vunpack.c.l.b16 %v191
    %v646 = vunpack.c.h.b16 %v191
    %v647 = vunpack.c.l.b16 %v192
    %v648 = vunpack.c.h.b16 %v192
    %v649 = vunpack.c.l.b16 %v193
    %v650 = vunpack.c.h.b16 %v193
    %v651 = vunpack.c.l.b16 %v194
    %v652 = vunpack.c.h.b16 %v194
    %v653 = vunpack.c.l.b16 %v195
    %v654 = vunpack.c.h.b16 %v195
    %v655 = vunpack.c.l.b16 %v196
    %v656 = vunpack.c.h.b16 %v196
    %v657 = vunpack.c.l.b16 %v197
    %v658 = vunpack.c.h.b16 %v197
    %v659 = vunpack.c.l.b16 %v198
    %v660 = vunpack.c.h.b16 %v198
    %v661 = vunpack.c.l.b16 %v199
    %v662 = vunpack.c.h.b16 %v199
    %v663 = vunpack.c.l.b16 %v200
    %v664 = vunpack.c.h.b16 %v200
    %v665 = vunpack.c.l.b16 %v201
    %v666 = vunpack.c.h.b16 %v201
    %v667 = vunpack.c.l.b16 %v202
    %v668 = vunpack.c.h.b16 %v202
    %v669 = vunpack.c.l.b16 %v203
    %v670 = vunpack.c.h.b16 %v203
    %v671 = vunpack.c.l.b16 %v204
    %v672 = vunpack.c.h.b16 %v204
    %v673 = vunpack.c.l.b16 %v205
    %v674 = vunpack.c.h.b16 %v205
    %v675 = vunpack.c.l.b16 %v206
    %v676 = vunpack.c.h.b16 %v206
    %v677 = vunpack.c.l.b16 %v207
    %v678 = vunpack.c.h.b16 %v207
    %v679 = vunpack.c.l.b16 %v208
    %v680 = vunpack.c.h.b16 %v208
    %v681 = vunpack.c.l.b16 %v209
    %v682 = vunpack.c.h.b16 %v209
    %v683 = vunpack.c.l.b16 %v210
    %v684 = vunpack.c.h.b16 %v210
    %v685 = vunpack.c.l.b16 %v211
    %v686 = vunpack.c.h.b16 %v211
    %v687 = vunpack.c.l.b16 %v212
    %v688 = vunpack.c.h.b16 %v212
    %v689 = vunpack.c.l.b16 %v213
    %v690 = vunpack.c.h.b16 %v213
    %v691 = vunpack.c.l.b16 %v214
    %v692 = vunpack.c.h.b16 %v214
    %v693 = vunpack.c.l.b16 %v215
    %v694 = vunpack.c.h.b16 %v215
    %v695 = vunpack.c.l.b16 %v216
    %v696 = vunpack.c.h.b16 %v216
    %v697 = vunpack.c.l.b16 %v217
    %v698 = vunpack.c.h.b16 %v217
    %v699 = vunpack.c.l.b16 %v218
    %v700 = vunpack.c.h.b16 %v218
    %v701 = vunpack.c.l.b16 %v219
    %v702 = vunpack.c.h.b16 %v219
    %v703 = vunpack.c.l.b16 %v220
    %v704 = vunpack.c.h.b16 %v220
    %v705 = vunpack.c.l.b16 %v221
    %v706 = vunpack.c.h.b16 %v221
    %v707 = vunpack.c.l.b16 %v222
    %v708 = vunpack.c.h.b16 %v222
    %v709 = vunpack.c.l.b16 %v223
    %v710 = vunpack.c.h.b16 %v223
    %v711 = vunpack.c.l.b16 %v224
    %v712 = vunpack.c.h.b16 %v224
    %v713 = vunpack.c.l.b16 %v225
    %v714 = vunpack.c.h.b16 %v225
    %v715 = vunpack.c.l.b16 %v226
    %v716 = vunpack.c.h.b16 %v226
    %v717 = vunpack.c.l.b16 %v227
    %v718 = vunpack.c.h.b16 %v227
    %v719 = vunpack.c.l.b16 %v228
    %v720 = vunpack.c.h.b16 %v228
    %v721 = vunpack.c.l.b16 %v229
    %v722 = vunpack.c.h.b16 %v229
    %v723 = vunpack.c.l.b16 %v230
    %v724 = vunpack.c.h.b16 %v230
    %v725 = vunpack.c.l.b16 %v231
    %v726 = vunpack.c.h.b16 %v231
    %v727 = vunpack.c.l.b16 %v232
    %v728 = vunpack.c.h.b16 %v232
    %v729 = vunpack.c.l.b16 %v233
    %v730 = vunpack.c.h.b16 %v233
    %v731 = vunpack.c.l.b16 %v234
    %v732 = vunpack.c.h.b16 %v234
    %v733 = vunpack.c.l.b16 %v235
    %v734 = vunpack.c.h.b16 %v235
    %v735 = vunpack.c.l.b16 %v236
    %v736 = vunpack.c.h.b16 %v236
    %v737 = vunpack.c.l.b16 %v237
    %v738 = vunpack.c.h.b16 %v237
    %v739 = vunpack.c.l.b16 %v238
    %v740 = vunpack.c.h.b16 %v238
    %v741 = vunpack.c.l.b16 %v239
    %v742 = vunpack.c.h.b16 %v239
    %v743 = vunpack.c.l.b16 %v240
    %v744 = vunpack.c.h.b16 %v240
    %v745 = vunpack.c.l.b16 %v241
    %v746 = vunpack.c.h.b16 %v241
    %v747 = vunpack.c.l.b16 %v242
    %v748 = vunpack.c.h.b16 %v242
    %v749 = vunpack.c.l.b16 %v243
    %v750 = vunpack.c.h.b16 %v243
    %v751 = vunpack.c.l.b16 %v244
    %v752 = vunpack.c.h.b16 %v244
    %v753 = vunpack.c.l.b16 %v245
    %v754 = vunpack.c.h.b16 %v245
    %v755 = vunpack.c.l.b16 %v246
    %v756 = vunpack.c.h.b16 %v246
    %v757 = vunpack.c.l.b16 %v247
    %v758 = vunpack.c.h.b16 %v247
    %v759 = vunpack.c.l.b16 %v248
    %v760 = vunpack.c.h.b16 %v248
    %v761 = vunpack.c.l.b16 %v249
    %v762 = vunpack.c.h.b16 %v249
    %v763 = vunpack.c.l.b16 %v250
    %v764 = vunpack.c.h.b16 %v250
    %v765 = vunpack.c.l.b16 %v251
    %v766 = vunpack.c.h.b16 %v251
    %v767 = vunpack.c.l.b16 %v252
    %v768 = vunpack.c.h.b16 %v252
    %v769 = vunpack.c.l.b16 %v253
    %v770 = vunpack.c.h.b16 %v253
    %v771 = vunpack.c.l.b16 %v254
    %v772 = vunpack.c.h.b16 %v254
    %v773 = vunpack.c.l.b16 %v255
    %v774 = vunpack.c.h.b16 %v255
    %v775 = vunpack.c.l.b16 %v256
    %v776 = vunpack.c.h.b16 %v256
    %v777 = vunpack.c.l.b16 %v257
    %v778 = vunpack.c.h.b16 %v257
    %v779 = vunpack.c.l.b16 %v258
    %v780 = vunpack.c.h.b16 %v258
    %v781 = vunpack.c.l.b16 %v259
    %v782 = vunpack.c.h.b16 %v259
    %v783 = vunpack.c.l.b16 %v260
    %v784 = vunpack.c.h.b16 %v260
    %v785 = vunpack.c.l.b16 %v261
    %v786 = vunpack.c.h.b16 %v261
    %v787 = vunpack.c.l.b16 %v262
    %v788 = vunpack.c.h.b16 %v262
    %v789 = vunpack.c.l.b16 %v263
    %v790 = vunpack.c.h.b16 %v263
    %v791 = vunpack.c.l.b16 %v264
    %v792 = vunpack.c.h.b16 %v264
    %v793 = vunpack.c.l.b16 %v265
    %v794 = vunpack.c.h.b16 %v265
    %v795 = vunpack.c.l.b16 %v266
    %v796 = vunpack.c.h.b16 %v266
    %v797 = vunpack.c.l.b16 %v267
    %v798 = vunpack.c.h.b16 %v267
    %v799 = vunpack.c.l.b16 %v268
    %v800 = vunpack.c.h.b16 %v268
    %v801 = vunpack.c.l.b16 %v269
    %v802 = vunpack.c.h.b16 %v269
    %v803 = vunpack.c.l.b16 %v270
    %v804 = vunpack.c.h.b16 %v270
    %v805 = vunpack.c.l.b16 %v271
    %v806 = vunpack.c.h.b16 %v271
    %v807 = vunpack.c.l.b16 %v272
    %v808 = vunpack.c.h.b16 %v272
    %v809 = vunpack.c.l.b16 %v273
    %v810 = vunpack.c.h.b16 %v273
    %v811 = vunpack.c.l.b16 %v274
    %v812 = vunpack.c.h.b16 %v274
    %v813 = vunpack.c.l.b16 %v275
    %v814 = vunpack.c.h.b16 %v275
    %v815 = vunpack.c.l.b16 %v276
    %v816 = vunpack.c.h.b16 %v276
    %v817 = vunpack.c.l.b16 %v277
    %v818 = vunpack.c.h.b16 %v277
    %v819 = vunpack.c.l.b16 %v278
    %v820 = vunpack.c.h.b16 %v278
    %v821 = vunpack.c.l.b16 %v279
    %v822 = vunpack.c.h.b16 %v279
    %v823 = vunpack.c.l.b16 %v280
    %v824 = vunpack.c.h.b16 %v280
    %v825 = vunpack.c.l.b16 %v281
    %v826 = vunpack.c.h.b16 %v281
    %v827 = vunpack.c.l.b16 %v282
    %v828 = vunpack.c.h.b16 %v282
    %v829 = vunpack.c.l.b16 %v283
    %v830 = vunpack.c.h.b16 %v283
    %v831 = vunpack.c.l.b16 %v284
    %v832 = vunpack.c.h.b16 %v284
    %v833 = vunpack.c.l.b16 %v285
    %v834 = vunpack.c.h.b16 %v285
    %v835 = vunpack.c.l.b16 %v286
    %v836 = vunpack.c.h.b16 %v286
    %v837 = vunpack.c.l.b16 %v287
    %v838 = vunpack.c.h.b16 %v287
    %v839 = vunpack.c.l.b16 %v288
    %v840 = vunpack.c.h.b16 %v288
    %v841 = vunpack.c.l.b16 %v289
    %v842 = vunpack.c.h.b16 %v289
    %v843 = vunpack.c.l.b16 %v290
    %v844 = vunpack.c.h.b16 %v290
    %v845 = vunpack.c.l.b16 %v291
    %v846 = vunpack.c.h.b16 %v291
    %v847 = vunpack.c.l.b16 %v292
    %v848 = vunpack.c.h.b16 %v292
    %v849 = vunpack.c.l.b16 %v293
    %v850 = vunpack.c.h.b16 %v293
    %v851 = vunpack.c.l.b16 %v294
    %v852 = vunpack.c.h.b16 %v294
    %v853 = vunpack.c.l.b16 %v295
    %v854 = vunpack.c.h.b16 %v295
    %v855 = vunpack.c.l.b16 %v296
    %v856 = vunpack.c.h.b16 %v296
    %v857 = vunpack.c.l.b16 %v297
    %v858 = vunpack.c.h.b16 %v297
    %v859 = vunpack.c.l.b16 %v298
    %v860 = vunpack.c.h.b16 %v298
    %v861 = vunpack.c.l.b16 %v299
    %v862 = vunpack.c.h.b16 %v299
    %v863 = vunpack.c.l.b16 %v300
    %v864 = vunpack.c.h.b16 %v300
    %v865 = vunpack.c.l.b16 %v301
    %v866 = vunpack.c.h.b16 %v301
    %v867 = vunpack.c.l.b16 %v302
    %v868 = vunpack.c.h.b16 %v302
    %v869 = vunpack.c.l.b16 %v303
    %v870 = vunpack.c.h.b16 %v303
    %v871 = vunpack.c.l.b16 %v304
    %v872 = vunpack.c.h.b16 %v304
    %v873 = vunpack.c.l.b16 %v305
    %v874 = vunpack.c.h.b16 %v305
    %v875 = vunpack.c.l.b16 %v306
    %v876 = vunpack.c.h.b16 %v306
    %v877 = vunpack.c.l.b16 %v307
    %v878 = vunpack.c.h.b16 %v307
    %v879 = vunpack.c.l.b16 %v308
    %v880 = vunpack.c.h.b16 %v308
    %v881 = vunpack.c.l.b16 %v309
    %v882 = vunpack.c.h.b16 %v309
    %v883 = vunpack.c.l.b16 %v310
    %v884 = vunpack.c.h.b16 %v310
    %v885 = vunpack.c.l.b16 %v311
    %v886 = vunpack.c.h.b16 %v311
    %v887 = vunpack.c.l.b16 %v312
    %v888 = vunpack.c.h.b16 %v312
    %v889 = vunpack.c.l.b16 %v313
    %v890 = vunpack.c.h.b16 %v313
    %v891 = vunpack.c.l.b16 %v314
    %v892 = vunpack.c.h.b16 %v314
    %v893 = vunpack.c.l.b16 %v315
    %v894 = vunpack.c.h.b16 %v315
    %v895 = vunpack.c.l.b16 %v316
    %v896 = vunpack.c.h.b16 %v316
    %v897 = vunpack.c.l.b16 %v317
    %v898 = vunpack.c.h.b16 %v317
    %v899 = vunpack.c.l.b16 %v318
    %v900 = vunpack.c.h.b16 %v318
    %v901 = vunpack.c.l.b16 %v319
    %v902 = vunpack.c.h.b16 %v319
    %v903 = vunpack.c.l.b16 %v320
    %v904 = vunpack.c.h.b16 %v320
    %v905 = vunpack.c.l.b16 %v321
    %v906 = vunpack.c.h.b16 %v321
    %v907 = vunpack.c.l.b16 %v322
    %v908 = vunpack.c.h.b16 %v322
    %v909 = vunpack.c.l.b16 %v323
    %v910 = vunpack.c.h.b16 %v323
    %v911 = vunpack.c.l.b16 %v324
    %v912 = vunpack.c.h.b16 %v324
    %v913 = vunpack.c.l.b16 %v325
    %v914 = vunpack.c.h.b16 %v325
    %v915 = vunpack.c.l.b16 %v326
    %v916 = vunpack.c.h.b16 %v326
    %v917 = vunpack.c.l.b16 %v327
    %v918 = vunpack.c.h.b16 %v327
    %v919 = vunpack.c.l.b16 %v328
    %v920 = vunpack.c.h.b16 %v328
    %v921 = vunpack.c.l.b16 %v329
    %v922 = vunpack.c.h.b16 %v329
    %v923 = vunpack.c.l.b16 %v330
    %v924 = vunpack.c.h.b16 %v330
    %v925 = vunpack.c.l.b16 %v331
    %v926 = vunpack.c.h.b16 %v331
    %v927 = vunpack.c.l.b16 %v332
    %v928 = vunpack.c.h.b16 %v332
    %v929 = vunpack.c.l.b16 %v333
    %v930 = vunpack.c.h.b16 %v333
    %v931 = vunpack.c.l.b16 %v334
    %v932 = vunpack.c.h.b16 %v334
    %v933 = vunpack.c.l.b16 %v335
    %v934 = vunpack.c.h.b16 %v335
    %v935 = vunpack.c.l.b16 %v336
    %v936 = vunpack.c.h.b16 %v336
    %v937 = vunpack.c.l.b16 %v337
    %v938 = vunpack.c.h.b16 %v337
    %v939 = vunpack.c.l.b16 %v338
    %v940 = vunpack.c.h.b16 %v338
    %v941 = vunpack.c.l.b16 %v339
    %v942 = vunpack.c.h.b16 %v339
    %v943 = vunpack.c.l.b16 %v340
    %v944 = vunpack.c.h.b16 %v340
    %v945 = vunpack.c.l.b16 %v341
    %v946 = vunpack.c.h.b16 %v341
    %v947 = vunpack.c.l.b16 %v342
    %v948 = vunpack.c.h.b16 %v342
    %v949 = vunpack.c.l.b16 %v343
    %v950 = vunpack.c.h.b16 %v343
    %v951 = vunpack.c.l.b16 %v344
    %v952 = vunpack.c.h.b16 %v344
    %v953 = vunpack.c.l.b16 %v345
    %v954 = vunpack.c.h.b16 %v345
    %v955 = vunpack.c.l.b16 %v346
    %v956 = vunpack.c.h.b16 %v346
    %v957 = vpack.c.b16 %v569, %v565
    %v958 = vpack.c.b16 %v570, %v566
    %v959 = vpack.c.b16 %v571, %v567
    %v960 = vpack.c.b16 %v572, %v568
    %v961 = vpack.c.b16 %v577, %v573
    %v962 = vpack.c.b16 %v578, %v574
    %v963 = vpack.c.b16 %v579, %v575
    %v964 = vpack.c.b16 %v580, %v576
    %v965 = vpack.c.b16 %v585, %v581
    %v966 = vpack.c.b16 %v586, %v582
    %v967 = vpack.c.b16 %v587, %v583
    %v968 = vpack.c.b16 %v588, %v584
    %v969 = vpack.c.b16 %v593, %v589
    %v970 = vpack.c.b16 %v594, %v590
    %v971 = vpack.c.b16 %v595, %v591
    %v972 = vpack.c.b16 %v596, %v592
    %v973 = vpack.c.b16 %v601, %v597
    %v974 = vpack.c.b16 %v602, %v598
    %v975 = vpack.c.b16 %v603, %v599
    %v976 = vpack.c.b16 %v604, %v600
    %v977 = vpack.c.b16 %v609, %v605
    %v978 = vpack.c.b16 %v610, %v606
    %v979 = vpack.c.b16 %v611, %v607
    %v980 = vpack.c.b16 %v612, %v608
    %v981 = vpack.c.b16 %v617, %v613
    %v982 = vpack.c.b16 %v618, %v614
    %v983 = vpack.c.b16 %v619, %v615
    %v984 = vpack.c.b16 %v620, %v616
    %v985 = vpack.c.b16 %v625, %v621
    %v986 = vpack.c.b16 %v626, %v622
    %v987 = vpack.c.b16 %v627, %v623
    %v988 = vpack.c.b16 %v628, %v624
    %v989 = vpack.c.b16 %v633, %v629
    %v990 = vpack.c.b16 %v634, %v630
    %v991 = vpack.c.b16 %v635, %v631
    %v992 = vpack.c.b16 %v636, %v632
    %v993 = vpack.c.b16 %v641, %v637
    %v994 = vpack.c.b16 %v642, %v638
    %v995 = vpack.c.b16 %v643, %v639
    %v996 = vpack.c.b16 %v644, %v640
    %v997 = vpack.c.b16 %v649, %v645
    %v998 = vpack.c.b16 %v650, %v646
    %v999 = vpack.c.b16 %v651, %v647
    %v1000 = vpack.c.b16 %v652, %v648
    %v1001 = vpack.c.b16 %v657, %v653
    %v1002 = vpack.c.b16 %v658, %v654
    %v1003 = vpack.c.b16 %v659, %v655
    %v1004 = vpack.c.b16 %v660, %v656
    %v1005 = vpack.c.b16 %v665, %v661
    %v1006 = vpack.c.b16 %v666, %v662
    %v1007 = vpack.c.b16 %v667, %v663
    %v1008 = vpack.c.b16 %v668, %v664
    %v1009 = vpack.c.b16 %v673, %v669
    %v1010 = vpack.c.b16 %v674, %v670
    %v1011 = vpack.c.b16 %v675, %v671
    %v1012 = vpack.c.b16 %v676, %v672
    %v1013 = vpack.c.b16 %v681, %v677
    %v1014 = vpack.c.b16 %v682, %v678
    %v1015 = vpack.c.b16 %v683, %v679
    %v1016 = vpack.c.b16 %v684, %v680
    %v1017 = vpack.c.b16 %v689, %v685
    %v1018 = vpack.c.b16 %v690, %v686
    %v1019 = vpack.c.b16 %v691, %v687
    %v1020 = vpack.c.b16 %v692, %v688
    %v1021 = vpack.c.b16 %v697, %v693
    %v1022 = vpack.c.b16 %v698, %v694
    %v1023 = vpack.c.b16 %v699, %v695
    %v1024 = vpack.c.b16 %v700, %v696
    %v1025 = vpack.c.b16 %v705, %v701
    %v1026 = vpack.c.b16 %v706, %v702
    %v1027 = vpack.c.b16 %v707, %v703
    %v1028 = vpack.c.b16 %v708, %v704
    %v1029 = vpack.c.b16 %v713, %v709
    %v1030 = vpack.c.b16 %v714, %v710
    %v1031 = vpack.c.b16 %v715, %v711
    %v1032 = vpack.c.b16 %v716, %v712
    %v1033 = vpack.c.b16 %v721, %v717
    %v1034 = vpack.c.b16 %v722, %v718
    %v1035 = vpack.c.b16 %v723, %v719
    %v1036 = vpack.c.b16 %v724, %v720
    %v1037 = vpack.c.b16 %v729, %v725
    %v1038 = vpack.c.b16 %v730, %v726
    %v1039 = vpack.c.b16 %v731, %v727
    %v1040 = vpack.c.b16 %v732, %v728
    %v1041 = vpack.c.b16 %v737, %v733
    %v1042 = vpack.c.b16 %v738, %v734
    %v1043 = vpack.c.b16 %v739, %v735
    %v1044 = vpack.c.b16 %v740, %v736
    %v1045 = vpack.c.b16 %v745, %v741
    %v1046 = vpack.c.b16 %v746, %v742
    %v1047 = vpack.c.b16 %v747, %v743
    %v1048 = vpack.c.b16 %v748, %v744
    %v1049 = vpack.c.b16 %v753, %v749
    %v1050 = vpack.c.b16 %v754, %v750
    %v1051 = vpack.c.b16 %v755, %v751
    %v1052 = vpack.c.b16 %v756, %v752
    %v1053 = vpack.c.b16 %v761, %v757
    %v1054 = vpack.c.b16 %v762, %v758
    %v1055 = vpack.c.b16 %v763, %v759
    %v1056 = vpack.c.b16 %v764, %v760
    %v1057 = vpack.c.b16 %v769, %v765
    %v1058 = vpack.c.b16 %v770, %v766
    %v1059 = vpack.c.b16 %v771, %v767
    %v1060 = vpack.c.b16 %v772, %v768
    %v1061 = vpack.c.b16 %v777, %v773
    %v1062 = vpack.c.b16 %v778, %v774
    %v1063 = vpack.c.b16 %v779, %v775
    %v1064 = vpack.c.b16 %v780, %v776
    %v1065 = vpack.c.b16 %v785, %v781
    %v1066 = vpack.c.b16 %v786, %v782
    %v1067 = vpack.c.b16 %v787, %v783
    %v1068 = vpack.c.b16 %v788, %v784
    %v1069 = vpack.c.b16 %v793, %v789
    %v1070 = vpack.c.b16 %v794, %v790
    %v1071 = vpack.c.b16 %v795, %v791
    %v1072 = vpack.c.b16 %v796, %v792
    %v1073 = vpack.c.b16 %v801, %v797
    %v1074 = vpack.c.b16 %v802, %v798
    %v1075 = vpack.c.b16 %v803, %v799
    %v1076 = vpack.c.b16 %v804, %v800
    %v1077 = vpack.c.b16 %v809, %v805
    %v1078 = vpack.c.b16 %v810, %v806
    %v1079 = vpack.c.b16 %v811, %v807
    %v1080 = vpack.c.b16 %v812, %v808
    %v1081 = vpack.c.b16 %v817, %v813
    %v1082 = vpack.c.b16 %v818, %v814
    %v1083 = vpack.c.b16 %v819, %v815
    %v1084 = vpack.c.b16 %v820, %v816
    %v1085 = vpack.c.b16 %v825, %v821
    %v1086 = vpack.c.b16 %v826, %v822
    %v1087 = vpack.c.b16 %v827, %v823
    %v1088 = vpack.c.b16 %v828, %v824
    %v1089 = vpack.c.b16 %v833, %v829
    %v1090 = vpack.c.b16 %v834, %v830
    %v1091 = vpack.c.b16 %v835, %v831
    %v1092 = vpack.c.b16 %v836, %v832
    %v1093 = vpack.c.b16 %v841, %v837
    %v1094 = vpack.c.b16 %v842, %v838
    %v1095 = vpack.c.b16 %v843, %v839
    %v1096 = vpack.c.b16 %v844, %v840
    %v1097 = vpack.c.b16 %v849, %v845
    %v1098 = vpack.c.b16 %v850, %v846
    %v1099 = vpack.c.b16 %v851, %v847
    %v1100 = vpack.c.b16 %v852, %v848
    %v1101 = vpack.c.b16 %v857, %v853
    %v1102 = vpack.c.b16 %v858, %v854
    %v1103 = vpack.c.b16 %v859, %v855
    %v1104 = vpack.c.b16 %v860, %v856
    %v1105 = vpack.c.b16 %v865, %v861
    %v1106 = vpack.c.b16 %v866, %v862
    %v1107 = vpack.c.b16 %v867, %v863
    %v1108 = vpack.c.b16 %v868, %v864
    %v1109 = vpack.c.b16 %v873, %v869
    %v1110 = vpack.c.b16 %v874, %v870
    %v1111 = vpack.c.b16 %v875, %v871
    %v1112 = vpack.c.b16 %v876, %v872
    %v1113 = vpack.c.b16 %v881, %v877
    %v1114 = vpack.c.b16 %v882, %v878
    %v1115 = vpack.c.b16 %v883, %v879
    %v1116 = vpack.c.b16 %v884, %v880
    %v1117 = vpack.c.b16 %v889, %v885
    %v1118 = vpack.c.b16 %v890, %v886
    %v1119 = vpack.c.b16 %v891, %v887
    %v1120 = vpack.c.b16 %v892, %v888
    %v1121 = vpack.c.b16 %v897, %v893
    %v1122 = vpack.c.b16 %v898, %v894
    %v1123 = vpack.c.b16 %v899, %v895
    %v1124 = vpack.c.b16 %v900, %v896
    %v1125 = vpack.c.b16 %v905, %v901
    %v1126 = vpack.c.b16 %v906, %v902
    %v1127 = vpack.c.b16 %v907, %v903
    %v1128 = vpack.c.b16 %v908, %v904
    %v1129 = vpack.c.b16 %v913, %v909
    %v1130 = vpack.c.b16 %v914, %v910
    %v1131 = vpack.c.b16 %v915, %v911
    %v1132 = vpack.c.b16 %v916, %v912
    %v1133 = vpack.c.b16 %v921, %v917
    %v1134 = vpack.c.b16 %v922, %v918
    %v1135 = vpack.c.b16 %v923, %v919
    %v1136 = vpack.c.b16 %v924, %v920
    %v1137 = vpack.c.b16 %v929, %v925
    %v1138 = vpack.c.b16 %v930, %v926
    %v1139 = vpack.c.b16 %v931, %v927
    %v1140 = vpack.c.b16 %v932, %v928
    %v1141 = vpack.c.b16 %v937, %v933
    %v1142 = vpack.c.b16 %v938, %v934
    %v1143 = vpack.c.b16 %v939, %v935
    %v1144 = vpack.c.b16 %v940, %v936
    %v1145 = vpack.c.b16 %v945, %v941
    %v1146 = vpack.c.b16 %v946, %v942
    %v1147 = vpack.c.b16 %v947, %v943
    %v1148 = vpack.c.b16 %v948, %v944
    %v1149 = vpack.c.b16 %v953, %v949
    %v1150 = vpack.c.b16 %v954, %v950
    %v1151 = vpack.c.b16 %v955, %v951
    %v1152 = vpack.c.b16 %v956, %v952
    %vm1349 = vcmask 130048
    %v1351 = vsel %vm1349, %v150, 0
    %1353 = vmatprep.subr.bf16.mxu0 %v958
    %1354 = vmatpush1.bf16.msra.mxu0 %v957
    %1355 = vmatprep.subr.bf16.mxu0 %v962
    %1356 = vmatpush1.bf16.msra.mxu0 %v961
    %1357 = vmatprep.subr.bf16.mxu0 %v966
    %1358 = vmatpush1.bf16.msra.mxu0 %v965
    %1359 = vmatprep.subr.bf16.mxu0 %v970
    %1360 = vmatpush1.bf16.msra.mxu0 %v969
    %1361 = vmatprep.subr.bf16.mxu0 %v974
    %1362 = vmatpush1.bf16.msra.mxu0 %v973
    %1363 = vmatprep.subr.bf16.mxu0 %v978
    %1364 = vmatpush1.bf16.msra.mxu0 %v977
    %1365 = vmatprep.subr.bf16.mxu0 %v982
    %1366 = vmatpush1.bf16.msra.mxu0 %v981
    %1367 = vmatprep.subr.bf16.mxu0 %v986
    %1368 = vmatpush1.bf16.msra.mxu0 %v985
    %1369 = vmatprep.subr.bf16.mxu0 %v990
    %1370 = vmatpush1.bf16.msra.mxu0 %v989
    %1371 = vmatprep.subr.bf16.mxu0 %v994
    %1372 = vmatpush1.bf16.msra.mxu0 %v993
    %1373 = vmatprep.subr.bf16.mxu0 %v998
    %1374 = vmatpush1.bf16.msra.mxu0 %v997
    %1375 = vmatprep.subr.bf16.mxu0 %v1002
    %1376 = vmatpush1.bf16.msra.mxu0 %v1001
    %1377 = vmatprep.subr.bf16.mxu0 %v1006
    %1378 = vmatpush1.bf16.msra.mxu0 %v1005
    %1379 = vmatprep.subr.bf16.mxu0 %v1010
    %1380 = vmatpush1.bf16.msra.mxu0 %v1009
    %1381 = vmatprep.subr.bf16.mxu0 %v1014
    %1382 = vmatpush1.bf16.msra.mxu0 %v1013
    %1383 = vmatprep.subr.bf16.mxu0 %v1018
    %1384 = vmatpush1.bf16.msra.mxu0 %v1017
    %1385 = vmatprep.mubr.bf16.mxu0 %v145
    %1386 = vmatmul.mubr.bf16.gmra.mrb[0].mxu0 %v144
    %v1387 = vpop.f32.mrb[0].mxu0
    %v1388 = vadd.f32 %v352, %v1387
    %v1389 = vpop.f32.mrb[0].mxu0
    %v1390 = vadd.f32 %v356, %v1389
    %v1391 = vpop.f32.mrb[0].mxu0
    %v1392 = vpop.f32.mrb[0].mxu0
    %1393 = vdwg.mxu0
    %1394 = vmatprep.subr.bf16.mxu0 %v1022
    %1395 = vmatpush1.bf16.msra.mxu0 %v1021
    %1396 = vmatprep.subr.bf16.mxu0 %v1026
    %1397 = vmatpush1.bf16.msra.mxu0 %v1025
    %1398 = vmatprep.subr.bf16.mxu0 %v1030
    %1399 = vmatpush1.bf16.msra.mxu0 %v1029
    %1400 = vmatprep.subr.bf16.mxu0 %v1034
    %1401 = vmatpush1.bf16.msra.mxu0 %v1033
    %1402 = vmatprep.subr.bf16.mxu0 %v1038
    %1403 = vmatpush1.bf16.msra.mxu0 %v1037
    %1404 = vmatprep.subr.bf16.mxu0 %v1042
    %1405 = vmatpush1.bf16.msra.mxu0 %v1041
    %1406 = vmatprep.subr.bf16.mxu0 %v1046
    %1407 = vmatpush1.bf16.msra.mxu0 %v1045
    %1408 = vmatprep.subr.bf16.mxu0 %v1050
    %1409 = vmatpush1.bf16.msra.mxu0 %v1049
    %1410 = vmatprep.subr.bf16.mxu0 %v1054
    %1411 = vmatpush1.bf16.msra.mxu0 %v1053
    %1412 = vmatprep.subr.bf16.mxu0 %v1058
    %1413 = vmatpush1.bf16.msra.mxu0 %v1057
    %1414 = vmatprep.subr.bf16.mxu0 %v1062
    %1415 = vmatpush1.bf16.msra.mxu0 %v1061
    %1416 = vmatprep.subr.bf16.mxu0 %v1066
    %1417 = vmatpush1.bf16.msra.mxu0 %v1065
    %1418 = vmatprep.subr.bf16.mxu0 %v1070
    %1419 = vmatpush1.bf16.msra.mxu0 %v1069
    %1420 = vmatprep.subr.bf16.mxu0 %v1074
    %1421 = vmatpush1.bf16.msra.mxu0 %v1073
    %1422 = vmatprep.subr.bf16.mxu0 %v1078
    %1423 = vmatpush1.bf16.msra.mxu0 %v1077
    %1424 = vmatprep.subr.bf16.mxu0 %v1082
    %1425 = vmatpush1.bf16.msra.mxu0 %v1081
    %1426 = vmatprep.mubr.bf16.mxu0 %v147
    %1427 = vmatmul.mubr.bf16.gmra.mrb[0].mxu0 %v146
    %v1428 = vpop.f32.mrb[0].mxu0
    %v1429 = vadd.f32 %v1388, %v1428
    %v1430 = vpop.f32.mrb[0].mxu0
    %v1431 = vadd.f32 %v1390, %v1430
    %v1432 = vpop.f32.mrb[0].mxu0
    %v1433 = vpop.f32.mrb[0].mxu0
    %1434 = vdwg.mxu0
    %1435 = vmatprep.subr.bf16.mxu0 %v1086
    %1436 = vmatpush1.bf16.msra.mxu0 %v1085
    %1437 = vmatprep.subr.bf16.mxu0 %v1090
    %1438 = vmatpush1.bf16.msra.mxu0 %v1089
    %1439 = vmatprep.subr.bf16.mxu0 %v1094
    %1440 = vmatpush1.bf16.msra.mxu0 %v1093
    %1441 = vmatprep.subr.bf16.mxu0 %v1098
    %1442 = vmatpush1.bf16.msra.mxu0 %v1097
    %1443 = vmatprep.subr.bf16.mxu0 %v1102
    %1444 = vmatpush1.bf16.msra.mxu0 %v1101
    %1445 = vmatprep.subr.bf16.mxu0 %v1106
    %1446 = vmatpush1.bf16.msra.mxu0 %v1105
    %1447 = vmatprep.subr.bf16.mxu0 %v1110
    %1448 = vmatpush1.bf16.msra.mxu0 %v1109
    %1449 = vmatprep.subr.bf16.mxu0 %v1114
    %1450 = vmatpush1.bf16.msra.mxu0 %v1113
    %1451 = vmatprep.subr.bf16.mxu0 %v1118
    %1452 = vmatpush1.bf16.msra.mxu0 %v1117
    %1453 = vmatprep.subr.bf16.mxu0 %v1122
    %1454 = vmatpush1.bf16.msra.mxu0 %v1121
    %1455 = vmatprep.subr.bf16.mxu0 %v1126
    %1456 = vmatpush1.bf16.msra.mxu0 %v1125
    %1457 = vmatprep.subr.bf16.mxu0 %v1130
    %1458 = vmatpush1.bf16.msra.mxu0 %v1129
    %1459 = vmatprep.subr.bf16.mxu0 %v1134
    %1460 = vmatpush1.bf16.msra.mxu0 %v1133
    %1461 = vmatprep.subr.bf16.mxu0 %v1138
    %1462 = vmatpush1.bf16.msra.mxu0 %v1137
    %1463 = vmatprep.subr.bf16.mxu0 %v1142
    %1464 = vmatpush1.bf16.msra.mxu0 %v1141
    %1465 = vmatprep.subr.bf16.mxu0 %v1146
    %1466 = vmatpush1.bf16.msra.mxu0 %v1145
    %1467 = vmatprep.mubr.bf16.mxu0 %v149
    %1468 = vmatmul.mubr.bf16.gmra.mrb[0].mxu0 %v148
    %v1469 = vpop.f32.mrb[0].mxu0
    %v1470 = vadd.f32 %v1429, %v1469
    %v1471 = vpop.f32.mrb[0].mxu0
    %v1472 = vadd.f32 %v1431, %v1471
    %v1473 = vpop.f32.mrb[0].mxu0
    %v1474 = vpop.f32.mrb[0].mxu0
    %1475 = vdwg.mxu0
    %1476 = vmatprep.subr.bf16.mxu0 %v1150
    %1477 = vmatpush1.bf16.msra.mxu0 %v1149
    %1478 = vmatprep.subr.bf16.mxu0 0
    %1479 = vmatpush1.bf16.msra.mxu0 0
    %1480 = vmatprep.subr.bf16.mxu0 0
    %1481 = vmatpush1.bf16.msra.mxu0 0
    %1482 = vmatprep.subr.bf16.mxu0 0
    %1483 = vmatpush1.bf16.msra.mxu0 0
    %1484 = vmatprep.subr.bf16.mxu0 0
    %1485 = vmatpush1.bf16.msra.mxu0 0
    %1486 = vmatprep.subr.bf16.mxu0 0
    %1487 = vmatpush1.bf16.msra.mxu0 0
    %1488 = vmatprep.subr.bf16.mxu0 0
    %1489 = vmatpush1.bf16.msra.mxu0 0
    %1490 = vmatprep.subr.bf16.mxu0 0
    %1491 = vmatpush1.bf16.msra.mxu0 0
    %1492 = vmatprep.subr.bf16.mxu0 0
    %1493 = vmatpush1.bf16.msra.mxu0 0
    %1494 = vmatprep.subr.bf16.mxu0 0
    %1495 = vmatpush1.bf16.msra.mxu0 0
    %1496 = vmatprep.subr.bf16.mxu0 0
    %1497 = vmatpush1.bf16.msra.mxu0 0
    %1498 = vmatprep.subr.bf16.mxu0 0
    %1499 = vmatpush1.bf16.msra.mxu0 0
    %1500 = vmatprep.subr.bf16.mxu0 0
    %1501 = vmatpush1.bf16.msra.mxu0 0
    %1502 = vmatprep.subr.bf16.mxu0 0
    %1503 = vmatpush1.bf16.msra.mxu0 0
    %1504 = vmatprep.subr.bf16.mxu0 0
    %1505 = vmatpush1.bf16.msra.mxu0 0
    %1506 = vmatprep.subr.bf16.mxu0 0
    %1507 = vmatpush1.bf16.msra.mxu0 0
    %1508 = vmatprep.mubr.bf16.mxu0 0
    %1509 = vmatmul.mubr.bf16.gmra.mrb[0].mxu0 %v1351
    %v1510 = vpop.f32.mrb[0].mxu0
    %v1511 = vadd.f32 %v1470, %v1510
    %v1512 = vpop.f32.mrb[0].mxu0
    %v1513 = vadd.f32 %v1472, %v1512
    %v1514 = vpop.f32.mrb[0].mxu0
    %v1515 = vpop.f32.mrb[0].mxu0
    %1516 = vdwg.mxu0
    %1517 = vmatprep.subr.bf16.mxu0 %v960
    %1518 = vmatpush1.bf16.msra.mxu0 %v959
    %1519 = vmatprep.subr.bf16.mxu0 %v964
    %1520 = vmatpush1.bf16.msra.mxu0 %v963
    %1521 = vmatprep.subr.bf16.mxu0 %v968
    %1522 = vmatpush1.bf16.msra.mxu0 %v967
    %1523 = vmatprep.subr.bf16.mxu0 %v972
    %1524 = vmatpush1.bf16.msra.mxu0 %v971
    %1525 = vmatprep.subr.bf16.mxu0 %v976
    %1526 = vmatpush1.bf16.msra.mxu0 %v975
    %1527 = vmatprep.subr.bf16.mxu0 %v980
    %1528 = vmatpush1.bf16.msra.mxu0 %v979
    %1529 = vmatprep.subr.bf16.mxu0 %v984
    %1530 = vmatpush1.bf16.msra.mxu0 %v983
    %1531 = vmatprep.subr.bf16.mxu0 %v988
    %1532 = vmatpush1.bf16.msra.mxu0 %v987
    %1533 = vmatprep.subr.bf16.mxu0 %v992
    %1534 = vmatpush1.bf16.msra.mxu0 %v991
    %1535 = vmatprep.subr.bf16.mxu0 %v996
    %1536 = vmatpush1.bf16.msra.mxu0 %v995
    %1537 = vmatprep.subr.bf16.mxu0 %v1000
    %1538 = vmatpush1.bf16.msra.mxu0 %v999
    %1539 = vmatprep.subr.bf16.mxu0 %v1004
    %1540 = vmatpush1.bf16.msra.mxu0 %v1003
    %1541 = vmatprep.subr.bf16.mxu0 %v1008
    %1542 = vmatpush1.bf16.msra.mxu0 %v1007
    %1543 = vmatprep.subr.bf16.mxu0 %v1012
    %1544 = vmatpush1.bf16.msra.mxu0 %v1011
    %1545 = vmatprep.subr.bf16.mxu0 %v1016
    %1546 = vmatpush1.bf16.msra.mxu0 %v1015
    %1547 = vmatprep.subr.bf16.mxu0 %v1020
    %1548 = vmatpush1.bf16.msra.mxu0 %v1019
    %1549 = vmatprep.mubr.bf16.mxu0 %v145
    %1550 = vmatmul.mubr.bf16.gmra.mrb[0].mxu0 %v144
    %v1551 = vpop.f32.mrb[0].mxu0
    %v1552 = vadd.f32 %v360, %v1551
    %v1553 = vpop.f32.mrb[0].mxu0
    %v1554 = vadd.f32 %v364, %v1553
    %v1555 = vpop.f32.mrb[0].mxu0
    %v1556 = vpop.f32.mrb[0].mxu0
    %1557 = vdwg.mxu0
    %1558 = vmatprep.subr.bf16.mxu0 %v1024
    %1559 = vmatpush1.bf16.msra.mxu0 %v1023
    %1560 = vmatprep.subr.bf16.mxu0 %v1028
    %1561 = vmatpush1.bf16.msra.mxu0 %v1027
    %1562 = vmatprep.subr.bf16.mxu0 %v1032
    %1563 = vmatpush1.bf16.msra.mxu0 %v1031
    %1564 = vmatprep.subr.bf16.mxu0 %v1036
    %1565 = vmatpush1.bf16.msra.mxu0 %v1035
    %1566 = vmatprep.subr.bf16.mxu0 %v1040
    %1567 = vmatpush1.bf16.msra.mxu0 %v1039
    %1568 = vmatprep.subr.bf16.mxu0 %v1044
    %1569 = vmatpush1.bf16.msra.mxu0 %v1043
    %1570 = vmatprep.subr.bf16.mxu0 %v1048
    %1571 = vmatpush1.bf16.msra.mxu0 %v1047
    %1572 = vmatprep.subr.bf16.mxu0 %v1052
    %1573 = vmatpush1.bf16.msra.mxu0 %v1051
    %1574 = vmatprep.subr.bf16.mxu0 %v1056
    %1575 = vmatpush1.bf16.msra.mxu0 %v1055
    %1576 = vmatprep.subr.bf16.mxu0 %v1060
    %1577 = vmatpush1.bf16.msra.mxu0 %v1059
    %1578 = vmatprep.subr.bf16.mxu0 %v1064
    %1579 = vmatpush1.bf16.msra.mxu0 %v1063
    %1580 = vmatprep.subr.bf16.mxu0 %v1068
    %1581 = vmatpush1.bf16.msra.mxu0 %v1067
    %1582 = vmatprep.subr.bf16.mxu0 %v1072
    %1583 = vmatpush1.bf16.msra.mxu0 %v1071
    %1584 = vmatprep.subr.bf16.mxu0 %v1076
    %1585 = vmatpush1.bf16.msra.mxu0 %v1075
    %1586 = vmatprep.subr.bf16.mxu0 %v1080
    %1587 = vmatpush1.bf16.msra.mxu0 %v1079
    %1588 = vmatprep.subr.bf16.mxu0 %v1084
    %1589 = vmatpush1.bf16.msra.mxu0 %v1083
    %1590 = vmatprep.mubr.bf16.mxu0 %v147
    %1591 = vmatmul.mubr.bf16.gmra.mrb[0].mxu0 %v146
    %v1592 = vpop.f32.mrb[0].mxu0
    %v1593 = vadd.f32 %v1552, %v1592
    %v1594 = vpop.f32.mrb[0].mxu0
    %v1595 = vadd.f32 %v1554, %v1594
    %v1596 = vpop.f32.mrb[0].mxu0
    %v1597 = vpop.f32.mrb[0].mxu0
    %1598 = vdwg.mxu0
    %1599 = vmatprep.subr.bf16.mxu0 %v1088
    %1600 = vmatpush1.bf16.msra.mxu0 %v1087
    %1601 = vmatprep.subr.bf16.mxu0 %v1092
    %1602 = vmatpush1.bf16.msra.mxu0 %v1091
    %1603 = vmatprep.subr.bf16.mxu0 %v1096
    %1604 = vmatpush1.bf16.msra.mxu0 %v1095
    %1605 = vmatprep.subr.bf16.mxu0 %v1100
    %1606 = vmatpush1.bf16.msra.mxu0 %v1099
    %1607 = vmatprep.subr.bf16.mxu0 %v1104
    %1608 = vmatpush1.bf16.msra.mxu0 %v1103
    %1609 = vmatprep.subr.bf16.mxu0 %v1108
    %1610 = vmatpush1.bf16.msra.mxu0 %v1107
    %1611 = vmatprep.subr.bf16.mxu0 %v1112
    %1612 = vmatpush1.bf16.msra.mxu0 %v1111
    %1613 = vmatprep.subr.bf16.mxu0 %v1116
    %1614 = vmatpush1.bf16.msra.mxu0 %v1115
    %1615 = vmatprep.subr.bf16.mxu0 %v1120
    %1616 = vmatpush1.bf16.msra.mxu0 %v1119
    %1617 = vmatprep.subr.bf16.mxu0 %v1124
    %1618 = vmatpush1.bf16.msra.mxu0 %v1123
    %1619 = vmatprep.subr.bf16.mxu0 %v1128
    %1620 = vmatpush1.bf16.msra.mxu0 %v1127
    %1621 = vmatprep.subr.bf16.mxu0 %v1132
    %1622 = vmatpush1.bf16.msra.mxu0 %v1131
    %1623 = vmatprep.subr.bf16.mxu0 %v1136
    %1624 = vmatpush1.bf16.msra.mxu0 %v1135
    %1625 = vmatprep.subr.bf16.mxu0 %v1140
    %1626 = vmatpush1.bf16.msra.mxu0 %v1139
    %1627 = vmatprep.subr.bf16.mxu0 %v1144
    %1628 = vmatpush1.bf16.msra.mxu0 %v1143
    %1629 = vmatprep.subr.bf16.mxu0 %v1148
    %1630 = vmatpush1.bf16.msra.mxu0 %v1147
    %1631 = vmatprep.mubr.bf16.mxu0 %v149
    %1632 = vmatmul.mubr.bf16.gmra.mrb[0].mxu0 %v148
    %v1633 = vpop.f32.mrb[0].mxu0
    %v1634 = vadd.f32 %v1593, %v1633
    %v1635 = vpop.f32.mrb[0].mxu0
    %v1636 = vadd.f32 %v1595, %v1635
    %v1637 = vpop.f32.mrb[0].mxu0
    %v1638 = vpop.f32.mrb[0].mxu0
    %1639 = vdwg.mxu0
    %1640 = vmatprep.subr.bf16.mxu0 %v1152
    %1641 = vmatpush1.bf16.msra.mxu0 %v1151
    %1642 = vmatprep.subr.bf16.mxu0 0
    %1643 = vmatpush1.bf16.msra.mxu0 0
    %1644 = vmatprep.subr.bf16.mxu0 0
    %1645 = vmatpush1.bf16.msra.mxu0 0
    %1646 = vmatprep.subr.bf16.mxu0 0
    %1647 = vmatpush1.bf16.msra.mxu0 0
    %1648 = vmatprep.subr.bf16.mxu0 0
    %1649 = vmatpush1.bf16.msra.mxu0 0
    %1650 = vmatprep.subr.bf16.mxu0 0
    %1651 = vmatpush1.bf16.msra.mxu0 0
    %1652 = vmatprep.subr.bf16.mxu0 0
    %1653 = vmatpush1.bf16.msra.mxu0 0
    %1654 = vmatprep.subr.bf16.mxu0 0
    %1655 = vmatpush1.bf16.msra.mxu0 0
    %1656 = vmatprep.subr.bf16.mxu0 0
    %1657 = vmatpush1.bf16.msra.mxu0 0
    %1658 = vmatprep.subr.bf16.mxu0 0
    %1659 = vmatpush1.bf16.msra.mxu0 0
    %1660 = vmatprep.subr.bf16.mxu0 0
    %1661 = vmatpush1.bf16.msra.mxu0 0
    %1662 = vmatprep.subr.bf16.mxu0 0
    %1663 = vmatpush1.bf16.msra.mxu0 0
    %1664 = vmatprep.subr.bf16.mxu0 0
    %1665 = vmatpush1.bf16.msra.mxu0 0
    %1666 = vmatprep.subr.bf16.mxu0 0
    %1667 = vmatpush1.bf16.msra.mxu0 0
    %1668 = vmatprep.subr.bf16.mxu0 0
    %1669 = vmatpush1.bf16.msra.mxu0 0
    %1670 = vmatprep.subr.bf16.mxu0 0
    %1671 = vmatpush1.bf16.msra.mxu0 0
    %1672 = vmatprep.mubr.bf16.mxu0 0
    %1673 = vmatmul.mubr.bf16.gmra.mrb[0].mxu0 %v1351
    %v1674 = vpop.f32.mrb[0].mxu0
    %v1675 = vadd.f32 %v1634, %v1674
    %v1676 = vpop.f32.mrb[0].mxu0
    %v1677 = vadd.f32 %v1636, %v1676
    %v1678 = vpop.f32.mrb[0].mxu0
    %v1679 = vpop.f32.mrb[0].mxu0
    %1680 = vdwg.mxu0
    %v1681 = vmax.f32 %v1511, 0.0
    %v1682 = vmax.f32 %v1513, 0.0
    %v1683 = vmax.f32 %v1675, 0.0
    %v1684 = vmax.f32 %v1677, 0.0
    %v1685 = vpack.c.bf16 %v1681, %v1681
    %v1686 = vpack.c.bf16 %v1682, %v1682
    %v1687 = vpack.c.bf16 %v1683, %v1683
    %v1688 = vpack.c.bf16 %v1684, %v1684
    %v1689 = vld [vmem:[#allocation5] sm:$0xf]
    %v1690 = vld [vmem:[#allocation5 + $0x4] sm:$0xf]
    %v1691 = vld [vmem:[#allocation5 + $0x8] sm:$0xf]
    %v1692 = vld [vmem:[#allocation5 + $0xc] sm:$0xf]
    %v1693 = vld [vmem:[#allocation5 + $0x10] sm:$0xf]
    %v1694 = vld [vmem:[#allocation5 + $0x14] sm:$0xf]
    %v1695 = vld [vmem:[#allocation5 + $0x18] sm:$0xf]
    %v1696 = vld [vmem:[#allocation5 + $0x1c] sm:$0xf]
    %v1697 = vld [vmem:[#allocation5 + $0x20] sm:$0xf]
    %v1698 = vld [vmem:[#allocation5 + $0x24] sm:$0xf]
    %v1699 = vld [vmem:[#allocation5 + $0x28] sm:$0xf]
    %v1700 = vld [vmem:[#allocation5 + $0x2c] sm:$0xf]
    %v1701 = vld [vmem:[#allocation5 + $0x30] sm:$0xf]
    %v1702 = vld [vmem:[#allocation5 + $0x34] sm:$0xf]
    %v1703 = vld [vmem:[#allocation5 + $0x38] sm:$0xf]
    %v1704 = vld [vmem:[#allocation5 + $0x3c] sm:$0xf]
    %v1705 = vld [vmem:[#allocation5 + $0x40] sm:$0xf]
    %v1706 = vld [vmem:[#allocation5 + $0x44] sm:$0xf]
    %v1707 = vld [vmem:[#allocation5 + $0x48] sm:$0xf]
    %v1708 = vld [vmem:[#allocation5 + $0x4c] sm:$0xf]
    %v1709 = vld [vmem:[#allocation5 + $0x50] sm:$0xf]
    %v1710 = vld [vmem:[#allocation5 + $0x54] sm:$0xf]
    %v1711 = vld [vmem:[#allocation5 + $0x58] sm:$0xf]
    %v1712 = vld [vmem:[#allocation5 + $0x5c] sm:$0xf]
    %v1713 = vld [vmem:[#allocation5 + $0x60] sm:$0xf]
    %v1714 = vld [vmem:[#allocation5 + $0x64] sm:$0xf]
    %v1715 = vld [vmem:[#allocation5 + $0x68] sm:$0xf]
    %v1716 = vld [vmem:[#allocation5 + $0x6c] sm:$0xf]
    %v1717 = vld [vmem:[#allocation5 + $0x70] sm:$0xf]
    %v1718 = vld [vmem:[#allocation5 + $0x74] sm:$0xf]
    %v1719 = vld [vmem:[#allocation5 + $0x78] sm:$0xf]
    %v1720 = vld [vmem:[#allocation5 + $0x7c] sm:$0xf]
    %v1721 = vld [vmem:[#allocation5 + $0x80] sm:$0xf]
    %v1722 = vld [vmem:[#allocation5 + $0x84] sm:$0xf]
    %v1723 = vld [vmem:[#allocation5 + $0x88] sm:$0xf]
    %v1724 = vld [vmem:[#allocation5 + $0x8c] sm:$0xf]
    %v1725 = vld [vmem:[#allocation5 + $0x90] sm:$0xf]
    %v1726 = vld [vmem:[#allocation5 + $0x94] sm:$0xf]
    %v1727 = vld [vmem:[#allocation5 + $0x98] sm:$0xf]
    %v1728 = vld [vmem:[#allocation5 + $0x9c] sm:$0xf]
    %v1729 = vld [vmem:[#allocation5 + $0xa0] sm:$0xf]
    %v1730 = vld [vmem:[#allocation5 + $0xa4] sm:$0xf]
    %v1731 = vld [vmem:[#allocation5 + $0xa8] sm:$0xf]
    %v1732 = vld [vmem:[#allocation5 + $0xac] sm:$0xf]
    %v1733 = vld [vmem:[#allocation5 + $0xb0] sm:$0xf]
    %v1734 = vld [vmem:[#allocation5 + $0xb4] sm:$0xf]
    %v1735 = vld [vmem:[#allocation5 + $0xb8] sm:$0xf]
    %v1736 = vld [vmem:[#allocation5 + $0xbc] sm:$0xf]
    %v1737 = vld [vmem:[#allocation5 + $0xc0] sm:$0xf]
    %v1738 = vld [vmem:[#allocation5 + $0xc4] sm:$0xf]
    %v1739 = vld [vmem:[#allocation5 + $0xc8] sm:$0xf]
    %v1740 = vld [vmem:[#allocation5 + $0xcc] sm:$0xf]
    %v1741 = vld [vmem:[#allocation5 + $0xd0] sm:$0xf]
    %v1742 = vld [vmem:[#allocation5 + $0xd4] sm:$0xf]
    %v1743 = vld [vmem:[#allocation5 + $0xd8] sm:$0xf]
    %v1744 = vld [vmem:[#allocation5 + $0xdc] sm:$0xf]
    %v1745 = vld [vmem:[#allocation5 + $0xe0] sm:$0xf]
    %v1746 = vld [vmem:[#allocation5 + $0xe4] sm:$0xf]
    %v1747 = vld [vmem:[#allocation5 + $0xe8] sm:$0xf]
    %v1748 = vld [vmem:[#allocation5 + $0xec] sm:$0xf]
    %v1749 = vld [vmem:[#allocation5 + $0xf0] sm:$0xf]
    %v1750 = vld [vmem:[#allocation5 + $0xf4] sm:$0xf]
    %v1751 = vld [vmem:[#allocation5 + $0xf8] sm:$0xf]
    %v1752 = vld [vmem:[#allocation5 + $0xfc] sm:$0xf]
    %v1753 = vld [vmem:[%s4] sm:$0x1]
    %v1755 = vlaneseq
    %v1756 = vshrl.u32 %v1755, 7
    %v1757 = vsub.s32 0, %v1756
    %v1758 = vrot.slane %v1753, %v1757
    %v1824 = vunpack.c.l.b16 %v1689
    %v1825 = vunpack.c.l.b16 %v1690
    %v1826 = vunpack.c.l.b16 %v1691
    %v1827 = vunpack.c.l.b16 %v1692
    %v1828 = vunpack.c.l.b16 %v1693
    %v1829 = vunpack.c.l.b16 %v1694
    %v1830 = vunpack.c.l.b16 %v1695
    %v1831 = vunpack.c.l.b16 %v1696
    %v1832 = vunpack.c.l.b16 %v1697
    %v1833 = vunpack.c.l.b16 %v1698
    %v1834 = vunpack.c.l.b16 %v1699
    %v1835 = vunpack.c.l.b16 %v1700
    %v1836 = vunpack.c.l.b16 %v1701
    %v1837 = vunpack.c.l.b16 %v1702
    %v1838 = vunpack.c.l.b16 %v1703
    %v1839 = vunpack.c.l.b16 %v1704
    %v1840 = vunpack.c.l.b16 %v1705
    %v1841 = vunpack.c.l.b16 %v1706
    %v1842 = vunpack.c.l.b16 %v1707
    %v1843 = vunpack.c.l.b16 %v1708
    %v1844 = vunpack.c.l.b16 %v1709
    %v1845 = vunpack.c.l.b16 %v1710
    %v1846 = vunpack.c.l.b16 %v1711
    %v1847 = vunpack.c.l.b16 %v1712
    %v1848 = vunpack.c.l.b16 %v1713
    %v1849 = vunpack.c.l.b16 %v1714
    %v1850 = vunpack.c.l.b16 %v1715
    %v1851 = vunpack.c.l.b16 %v1716
    %v1852 = vunpack.c.l.b16 %v1717
    %v1853 = vunpack.c.l.b16 %v1718
    %v1854 = vunpack.c.l.b16 %v1719
    %v1855 = vunpack.c.l.b16 %v1720
    %v1856 = vunpack.c.l.b16 %v1721
    %v1857 = vunpack.c.l.b16 %v1722
    %v1858 = vunpack.c.l.b16 %v1723
    %v1859 = vunpack.c.l.b16 %v1724
    %v1860 = vunpack.c.l.b16 %v1725
    %v1861 = vunpack.c.l.b16 %v1726
    %v1862 = vunpack.c.l.b16 %v1727
    %v1863 = vunpack.c.l.b16 %v1728
    %v1864 = vunpack.c.l.b16 %v1729
    %v1865 = vunpack.c.l.b16 %v1730
    %v1866 = vunpack.c.l.b16 %v1731
    %v1867 = vunpack.c.l.b16 %v1732
    %v1868 = vunpack.c.l.b16 %v1733
    %v1869 = vunpack.c.l.b16 %v1734
    %v1870 = vunpack.c.l.b16 %v1735
    %v1871 = vunpack.c.l.b16 %v1736
    %v1872 = vunpack.c.l.b16 %v1737
    %v1873 = vunpack.c.l.b16 %v1738
    %v1874 = vunpack.c.l.b16 %v1739
    %v1875 = vunpack.c.l.b16 %v1740
    %v1876 = vunpack.c.l.b16 %v1741
    %v1877 = vunpack.c.l.b16 %v1742
    %v1878 = vunpack.c.l.b16 %v1743
    %v1879 = vunpack.c.l.b16 %v1744
    %v1880 = vunpack.c.l.b16 %v1745
    %v1881 = vunpack.c.l.b16 %v1746
    %v1882 = vunpack.c.l.b16 %v1747
    %v1883 = vunpack.c.l.b16 %v1748
    %v1884 = vunpack.c.l.b16 %v1749
    %v1885 = vunpack.c.l.b16 %v1750
    %v1886 = vunpack.c.l.b16 %v1751
    %v1887 = vunpack.c.l.b16 %v1752
    %v1888 = vpack.c.b16 %v1825, %v1824
    %v1889 = vpack.c.b16 %v1827, %v1826
    %v1890 = vpack.c.b16 %v1829, %v1828
    %v1891 = vpack.c.b16 %v1831, %v1830
    %v1892 = vpack.c.b16 %v1833, %v1832
    %v1893 = vpack.c.b16 %v1835, %v1834
    %v1894 = vpack.c.b16 %v1837, %v1836
    %v1895 = vpack.c.b16 %v1839, %v1838
    %v1896 = vpack.c.b16 %v1841, %v1840
    %v1897 = vpack.c.b16 %v1843, %v1842
    %v1898 = vpack.c.b16 %v1845, %v1844
    %v1899 = vpack.c.b16 %v1847, %v1846
    %v1900 = vpack.c.b16 %v1849, %v1848
    %v1901 = vpack.c.b16 %v1851, %v1850
    %v1902 = vpack.c.b16 %v1853, %v1852
    %v1903 = vpack.c.b16 %v1855, %v1854
    %v1904 = vpack.c.b16 %v1857, %v1856
    %v1905 = vpack.c.b16 %v1859, %v1858
    %v1906 = vpack.c.b16 %v1861, %v1860
    %v1907 = vpack.c.b16 %v1863, %v1862
    %v1908 = vpack.c.b16 %v1865, %v1864
    %v1909 = vpack.c.b16 %v1867, %v1866
    %v1910 = vpack.c.b16 %v1869, %v1868
    %v1911 = vpack.c.b16 %v1871, %v1870
    %v1912 = vpack.c.b16 %v1873, %v1872
    %v1913 = vpack.c.b16 %v1875, %v1874
    %v1914 = vpack.c.b16 %v1877, %v1876
    %v1915 = vpack.c.b16 %v1879, %v1878
    %v1916 = vpack.c.b16 %v1881, %v1880
    %v1917 = vpack.c.b16 %v1883, %v1882
    %v1918 = vpack.c.b16 %v1885, %v1884
    %v1919 = vpack.c.b16 %v1887, %v1886
    %1952 = vmatprep.subr.bf16.mxu0 0
    %1953 = vmatpush1.bf16.msra.mxu0 %v1888
    %1954 = vmatprep.subr.bf16.mxu0 0
    %1955 = vmatpush1.bf16.msra.mxu0 %v1889
    %1956 = vmatprep.subr.bf16.mxu0 0
    %1957 = vmatpush1.bf16.msra.mxu0 %v1890
    %1958 = vmatprep.subr.bf16.mxu0 0
    %1959 = vmatpush1.bf16.msra.mxu0 %v1891
    %1960 = vmatprep.subr.bf16.mxu0 0
    %1961 = vmatpush1.bf16.msra.mxu0 %v1892
    %1962 = vmatprep.subr.bf16.mxu0 0
    %1963 = vmatpush1.bf16.msra.mxu0 %v1893
    %1964 = vmatprep.subr.bf16.mxu0 0
    %1965 = vmatpush1.bf16.msra.mxu0 %v1894
    %1966 = vmatprep.subr.bf16.mxu0 0
    %1967 = vmatpush1.bf16.msra.mxu0 %v1895
    %1968 = vmatprep.subr.bf16.mxu0 0
    %1969 = vmatpush1.bf16.msra.mxu0 %v1896
    %1970 = vmatprep.subr.bf16.mxu0 0
    %1971 = vmatpush1.bf16.msra.mxu0 %v1897
    %1972 = vmatprep.subr.bf16.mxu0 0
    %1973 = vmatpush1.bf16.msra.mxu0 %v1898
    %1974 = vmatprep.subr.bf16.mxu0 0
    %1975 = vmatpush1.bf16.msra.mxu0 %v1899
    %1976 = vmatprep.subr.bf16.mxu0 0
    %1977 = vmatpush1.bf16.msra.mxu0 %v1900
    %1978 = vmatprep.subr.bf16.mxu0 0
    %1979 = vmatpush1.bf16.msra.mxu0 %v1901
    %1980 = vmatprep.subr.bf16.mxu0 0
    %1981 = vmatpush1.bf16.msra.mxu0 %v1902
    %1982 = vmatprep.subr.bf16.mxu0 0
    %1983 = vmatpush1.bf16.msra.mxu0 %v1903
    %1984 = vmatprep.mubr.bf16.mxu0 %v1686
    %1985 = vmatmul.mubr.bf16.gmra.mrb[0].mxu0 %v1685
    %v1986 = vpop.f32.mrb[0].mxu0
    %v1987 = vadd.f32 %v1758, %v1986
    %v1988 = vpop.f32.mrb[0].mxu0
    %v1989 = vpop.f32.mrb[0].mxu0
    %v1990 = vpop.f32.mrb[0].mxu0
    %1991 = vdwg.mxu0
    %1992 = vmatprep.subr.bf16.mxu0 0
    %1993 = vmatpush1.bf16.msra.mxu0 %v1904
    %1994 = vmatprep.subr.bf16.mxu0 0
    %1995 = vmatpush1.bf16.msra.mxu0 %v1905
    %1996 = vmatprep.subr.bf16.mxu0 0
    %1997 = vmatpush1.bf16.msra.mxu0 %v1906
    %1998 = vmatprep.subr.bf16.mxu0 0
    %1999 = vmatpush1.bf16.msra.mxu0 %v1907
    %2000 = vmatprep.subr.bf16.mxu0 0
    %2001 = vmatpush1.bf16.msra.mxu0 %v1908
    %2002 = vmatprep.subr.bf16.mxu0 0
    %2003 = vmatpush1.bf16.msra.mxu0 %v1909
    %2004 = vmatprep.subr.bf16.mxu0 0
    %2005 = vmatpush1.bf16.msra.mxu0 %v1910
    %2006 = vmatprep.subr.bf16.mxu0 0
    %2007 = vmatpush1.bf16.msra.mxu0 %v1911
    %2008 = vmatprep.subr.bf16.mxu0 0
    %2009 = vmatpush1.bf16.msra.mxu0 %v1912
    %2010 = vmatprep.subr.bf16.mxu0 0
    %2011 = vmatpush1.bf16.msra.mxu0 %v1913
    %2012 = vmatprep.subr.bf16.mxu0 0
    %2013 = vmatpush1.bf16.msra.mxu0 %v1914
    %2014 = vmatprep.subr.bf16.mxu0 0
    %2015 = vmatpush1.bf16.msra.mxu0 %v1915
    %2016 = vmatprep.subr.bf16.mxu0 0
    %2017 = vmatpush1.bf16.msra.mxu0 %v1916
    %2018 = vmatprep.subr.bf16.mxu0 0
    %2019 = vmatpush1.bf16.msra.mxu0 %v1917
    %2020 = vmatprep.subr.bf16.mxu0 0
    %2021 = vmatpush1.bf16.msra.mxu0 %v1918
    %2022 = vmatprep.subr.bf16.mxu0 0
    %2023 = vmatpush1.bf16.msra.mxu0 %v1919
    %2024 = vmatprep.mubr.bf16.mxu0 %v1688
    %2025 = vmatmul.mubr.bf16.gmra.mrb[0].mxu0 %v1687
    %v2026 = vpop.f32.mrb[0].mxu0
    %v2027 = vadd.f32 %v1987, %v2026
    %v2028 = vpop.f32.mrb[0].mxu0
    %v2029 = vpop.f32.mrb[0].mxu0
    %v2030 = vpop.f32.mrb[0].mxu0
    %2031 = vdwg.mxu0
    %2032 = vst [vmem:[#allocation7] sm:$0xff] %v2027
    // Predicated region
    $region30: #{simple_nn_forward.1} parent=1 // pred_check
      _
    $region31: #{simple_nn_forward.1} parent=1 // pred_check_branch
      %2034 = sbr.rel (0) target = $region33
    $region32: #{simple_nn_forward.1} parent=1 // pred_region
      %s2036 = ssub.s32 128, 32
      %2037 = vsyncadd [#allocation4], %s2036
      %s2038 = sshll.u32 [#allocation7], 4
      %s2039 = int_to_ptr.vmem [resolvable:$true] %s2038
      %2044 = dma.vmem_to_hbm [thread:$0]  %s2039, 32, %s5, [#allocation4], 32, 32, 2
    $region33: #{simple_nn_forward.1} parent=1 // pred_fallthru
      _
    // Predicated region
    $region34: #{simple_nn_forward.1} parent=1 // pred_check
      _
    $region35: #{simple_nn_forward.1} parent=1 // pred_check_branch
      %2046 = sbr.rel (0) target = $region37
    $region36: #{simple_nn_forward.1} parent=1 // pred_region
      %2047 = dma.done [#allocation4], 128
    $region37: #{simple_nn_forward.1} parent=1 // pred_fallthru
      _
    %2048 = vsyncpa [#allocation3], 1
    %2049 = vsyncpa [#allocation6], 1
    %2050 = vsyncpa [#allocation4], 1

</llo_original>
